<compile_context>
chip_gen: v5e
topology: v5e:2x2
jax: 0.10.0
libtpu: 0.0.40
codegen_flags: <defaults>
</compile_context>

<pallas_src>
import jax
import jax.numpy as jnp
from jax.experimental import pallas as pl
from jax.experimental.pallas import tpu as pltpu


# -----------------------------------------------------------------------------
# Phase 1: serial LSTM recurrence (grid-less, everything VMEM-resident).
# -----------------------------------------------------------------------------
def lstm_recurrence_kernel(x_ref,    # (T, B, E)    bf16  time-major embedded inputs
                           wih_ref,  # (E, 4Hp)     bf16  fused input->gate weights (gate-padded)
                           whh_ref,  # (Hp, 4Hp)    bf16  fused hidden->gate weights (gate-padded)
                           b_ref,    # (1, 4Hp)     f32   merged bias b_ih + b_hh (gate-padded)
                           h_ref,    # (T, B, Hp)   bf16  OUT: hidden state at every step
                           pre_sc):  # (T, B, 4Hp)  f32   scratch: input-side pre-activations
    T, B, E = x_ref.shape
    Hp = whh_ref.shape[0]

    w_hh = whh_ref[...]                                           # (Hp, 4Hp) bf16

    # ---- hoisted input-side gate pre-activations (off the serial chain) -----
    # One big matmul with good MXU row occupancy instead of T tiny ones.
    x_all = x_ref[...].reshape(T * B, E)                          # (T*B, E) bf16
    pre = (jnp.dot(x_all, wih_ref[...], preferred_element_type=jnp.float32)
           + jnp.broadcast_to(b_ref[...], (T * B, 4 * Hp)))       # (T*B, 4Hp) f32
    pre_sc[...] = pre.reshape(T, B, 4 * Hp)

    # ---- serial recurrence: one dependent MXU matmul per step ----------------
    h_bf = jnp.zeros((B, Hp), jnp.bfloat16)                       # h0 = 0
    c = jnp.zeros((B, Hp), jnp.float32)                           # c0 = 0

    # T is small and static -> fully unrolled; every index below is static and
    # the LLO scheduler sees the whole dependency chain.
    # TODO(synk): for long captions switch to lax.fori_loop(..., unroll=4-8)
    # with pl.ds scratch indexing to bound code size / compile time.
    for t in range(T):
        if t == 0:
            gates = pre_sc[0]                                     # h0 == 0: skip the matmul
        else:
            gates = pre_sc[t] + jnp.dot(h_bf, w_hh,
                                        preferred_element_type=jnp.float32)
        # Hp is a multiple of 128 lanes -> each gate slice is whole vregs.
        i_g = jax.nn.sigmoid(gates[:, 0 * Hp:1 * Hp])
        f_g = jax.nn.sigmoid(gates[:, 1 * Hp:2 * Hp])
        g_g = jnp.tanh(gates[:, 2 * Hp:3 * Hp])
        o_g = jax.nn.sigmoid(gates[:, 3 * Hp:4 * Hp])
        c = f_g * c + i_g * g_g
        # NOTE: the recurrent h is carried in bf16 for the MXU; rounding error
        # compounds over time steps (validated vs the f32 reference at T=8).
        h_bf = (o_g * jnp.tanh(c)).astype(jnp.bfloat16)           # single cast / step
        h_ref[t] = h_bf                                           # one dense slab store / step


def lstm_recurrence_pallas(x_seq, w_ih, w_hh, b):
    """x_seq: (T, B, E) bf16 time-major.  Returns all hidden states (T, B, Hp) bf16."""
    T, B, _ = x_seq.shape
    Hp = w_hh.shape[0]
    # Everything fits easily in VMEM at these sizes -> one grid-less invocation
    # (no per-step pipeline bookkeeping on the serial chain).
    # TODO(synk): at production sizes set pltpu.CompilerParams(vmem_limit_bytes=...)
    # and re-derive residency against v7x's 64 MiB VMEM.
    return pl.pallas_call(
        lstm_recurrence_kernel,
        out_shape=jax.ShapeDtypeStruct((T, B, Hp), jnp.bfloat16),
        in_specs=[pl.BlockSpec(memory_space=pltpu.MemorySpace.VMEM)] * 4,
        out_specs=pl.BlockSpec(memory_space=pltpu.MemorySpace.VMEM),
        scratch_shapes=[pltpu.VMEM((T, B, 4 * Hp), jnp.float32)],
    )(x_seq, w_ih, w_hh, b)


# -----------------------------------------------------------------------------
# Phase 2: vocab projection, gridded & parallel over batch blocks.
# -----------------------------------------------------------------------------
def vocab_proj_kernel(h_ref,     # (B_BLK, T, Hp) bf16  batch-major hidden states
                      wout_ref,  # (Hp, V)        bf16  output Linear weight (transposed)
                      bout_ref,  # (1, V)         f32   output Linear bias
                      out_ref):  # (B_BLK, T, V)  f32   logits block
    b_blk, T, Hp = h_ref.shape
    V = wout_ref.shape[1]
    # One fused matmul per block, one bias add, one dense slab store.
    h2 = h_ref[...].reshape(b_blk * T, Hp)                        # (B_BLK*T, Hp) bf16
    logits = (jnp.dot(h2, wout_ref[...], preferred_element_type=jnp.float32)
              + jnp.broadcast_to(bout_ref[...], (b_blk * T, V)))  # (B_BLK*T, V) f32
    out_ref[...] = logits.reshape(b_blk, T, V).astype(out_ref.dtype)


def vocab_projection_pallas(h_bt, w_out, b_out, *, b_blk=None):
    """h_bt: (Bp, T, Hp) bf16 batch-major.  Returns logits (Bp, T, V) f32."""
    Bp, T, Hp = h_bt.shape
    V = w_out.shape[1]
    if b_blk is None:
        # Toy sizes: one block == one fully fused matmul.  At production B keep
        # b_blk at e.g. 8-32 so the parallel grid splits across v7x's two
        # TensorCores and keeps VMEM per step small.
        b_blk = Bp if Bp <= 8 else 8
    # TODO(synk): at production vocab sizes (~10k) also tile V in this grid,
    # stream w_out per V-tile with pipeline_mode=pl.Buffered(2), and (on v5e)
    # emit bf16 logits to halve the dominant HBM writeback.
    return pl.pallas_call(
        vocab_proj_kernel,
        out_shape=jax.ShapeDtypeStruct((Bp, T, V), jnp.float32),
        grid=(Bp // b_blk,),
        in_specs=[pl.BlockSpec((b_blk, T, Hp), lambda i: (i, 0, 0)),
                  pl.BlockSpec((Hp, V), lambda i: (0, 0)),
                  pl.BlockSpec((1, V), lambda i: (0, 0))],
        out_specs=pl.BlockSpec((b_blk, T, V), lambda i: (i, 0, 0)),
        compiler_params=pltpu.CompilerParams(
            dimension_semantics=("parallel",)),
    )(h_bt, w_out, b_out)


# -----------------------------------------------------------------------------
# DecoderRNN forward (embedding gather + padding glue in JAX, Pallas hot path).
# -----------------------------------------------------------------------------
def _round_up(x, m):
    return ((x + m - 1) // m) * m


def _pad_gate_cols(w, H, Hp):
    """(..., 4H) -> (..., 4Hp): zero-pad each of the fused i/f/g/o gate blocks."""
    if Hp == H:
        return w
    pad = [(0, 0)] * (w.ndim - 1) + [(0, Hp - H)]
    return jnp.concatenate(
        [jnp.pad(w[..., k * H:(k + 1) * H], pad) for k in range(4)], axis=-1)


def decoder_rnn_forward(params, features, captions):
    """
    features: (B, embed_size) f32
    captions: (B, cap_length) int32
    returns:  (B, cap_length, vocab_size) f32
    """
    B, _ = features.shape
    H = params["w_hh"].shape[0]
    Hp = _round_up(H, 128)          # lane-aligned per-gate hidden size
    Bp = _round_up(B, 8)            # sublane-aligned batch

    # --- gate-padded fused LSTM weights (zero pads keep padded lanes at 0) ----
    # TODO(synk): pre-pad these once at load time rather than per forward call.
    w_ih = _pad_gate_cols(params["w_ih"], H, Hp).astype(jnp.bfloat16)
    w_hh = _pad_gate_cols(
        jnp.pad(params["w_hh"], ((0, Hp - H), (0, 0))), H, Hp).astype(jnp.bfloat16)
    b_g = _pad_gate_cols(params["b_gates"], H, Hp)
    w_out = jnp.pad(params["w_out"], ((0, Hp - H), (0, 0))).astype(jnp.bfloat16)

    # --- batch padding: padded rows are computed and sliced away --------------
    feats = jnp.pad(features, ((0, Bp - B), (0, 0)))
    caps = jnp.pad(captions, ((0, Bp - B), (0, 0)))

    # Embedding lookup of captions[:, :-1], gathered directly in time-major
    # (T, Bp, E) layout (only the tiny int32 caption matrix is transposed).
    cap_t = caps[:, :-1].T                                            # (T-1, Bp)
    cap_emb = jnp.take(params["embed_w"], cap_t, axis=0)              # (T-1, Bp, E)
    x_seq = jnp.concatenate([feats[None, :, :], cap_emb], axis=0)     # (T, Bp, E)
    x_seq = x_seq.astype(jnp.bfloat16)

    # Phase 1: serial LSTM recurrence.
    h_all = lstm_recurrence_pallas(x_seq, w_ih, w_hh, b_g)            # (T, Bp, Hp) bf16

    # Tiny bf16 relayout (a few KB) so the projection consumes batch-major rows
    # and writes the (B, T, V) logits as dense, lane-aligned slabs with no
    # cross-sublane shuffles inside the kernel.
    h_bt = jnp.transpose(h_all, (1, 0, 2))                            # (Bp, T, Hp)

    # Phase 2: vocab projection (parallel over batch blocks).
    logits = vocab_projection_pallas(h_bt, w_out, params["b_out"])    # (Bp, T, V)
    return logits[:B]


# -----------------------------------------------------------------------------
# Pure-JAX f32 reference (PyTorch nn.LSTM / nn.Linear semantics).
# -----------------------------------------------------------------------------
def decoder_rnn_reference(params, features, captions):
    H = params["w_hh"].shape[0]
    w_ih, w_hh, b = params["w_ih"], params["w_hh"], params["b_gates"]
    w_out, b_out = params["w_out"], params["b_out"]

    cap_emb = jnp.take(params["embed_w"], captions[:, :-1], axis=0)   # (B, T-1, E)
    emb = jnp.concatenate([features[:, None, :], cap_emb], axis=1)    # (B, T, E)
    x_seq = jnp.transpose(emb, (1, 0, 2)).astype(jnp.float32)         # (T, B, E)
    B = x_seq.shape[1]

    def step(carry, x):
        h, c = carry
        gates = x @ w_ih + h @ w_hh + b                               # (B, 4H)
        i = jax.nn.sigmoid(gates[:, 0 * H:1 * H])
        f = jax.nn.sigmoid(gates[:, 1 * H:2 * H])
        g = jnp.tanh(gates[:, 2 * H:3 * H])
        o = jax.nn.sigmoid(gates[:, 3 * H:4 * H])
        c = f * c + i * g
        h = o * jnp.tanh(c)
        return (h, c), h @ w_out + b_out

    init = (jnp.zeros((B, H), jnp.float32), jnp.zeros((B, H), jnp.float32))
    _, outs = jax.lax.scan(step, init, x_seq)                         # (T, B, V)
    return jnp.transpose(outs, (1, 0, 2))                             # (B, T, V)


# -----------------------------------------------------------------------------
# Deterministic parameter init (nn.Embedding / nn.LSTM / nn.Linear shapes,
# gates pre-fused to (*, 4H) in i,f,g,o order with b_ih + b_hh merged).
# -----------------------------------------------------------------------------
def init_params(key, embed_size, hidden_size, vocab_size):
    ks = jax.random.split(key, 7)
    scale = 0.1
    embed_w = scale * jax.random.normal(ks[0], (vocab_size, embed_size), jnp.float32)
    w_ih = scale * jax.random.normal(ks[1], (embed_size, 4 * hidden_size), jnp.float32)
    w_hh = scale * jax.random.normal(ks[2], (hidden_size, 4 * hidden_size), jnp.float32)
    b_ih = scale * jax.random.normal(ks[3], (1, 4 * hidden_size), jnp.float32)
    b_hh = scale * jax.random.normal(ks[4], (1, 4 * hidden_size), jnp.float32)
    w_out = scale * jax.random.normal(ks[5], (hidden_size, vocab_size), jnp.float32)
    b_out = scale * jax.random.normal(ks[6], (1, vocab_size), jnp.float32)
    return dict(embed_w=embed_w, w_ih=w_ih, w_hh=w_hh, b_gates=b_ih + b_hh,
                w_out=w_out, b_out=b_out)


if __name__ == "__main__":
    B = 2      # batch size
    E = 32     # embed_size
    H = 32     # hidden_size
    V = 128    # vocab_size
    L = 8      # caption length -> LSTM sequence length T = 1 + (L-1) = L

    key = jax.random.PRNGKey(0)
    k_feat, k_cap, k_par = jax.random.split(key, 3)

    params = init_params(k_par, E, H, V)
    features = jax.random.normal(k_feat, (B, E), jnp.float32)
    captions = jax.random.randint(k_cap, (B, L), 0, V, dtype=jnp.int32)

    out = jax.block_until_ready(jax.jit(decoder_rnn_forward)(params, features, captions))
    ref = jax.block_until_ready(jax.jit(decoder_rnn_reference)(params, features, captions))

    assert out.shape == (B, L, V), out.shape
    # bf16 matmul operands (f32 accumulation) vs. the pure-f32 reference:
    # relaxed tolerance; the bf16 recurrent-h drift was validated at this T.
    max_err = float(jnp.max(jnp.abs(out - ref)))
    assert jnp.allclose(out, ref, atol=2e-2, rtol=2e-2), max_err

    print("KERNEL_OK")
</pallas_src>

<mosaic_0001>
module attributes {stable_mosaic.version = 11 : i64} {
  func.func @vocab_proj_kernel(%arg0: i32, %arg1: memref<8x8x128xbf16, #tpu.memory_space<vmem>>, %arg2: memref<128x128xbf16, #tpu.memory_space<vmem>>, %arg3: memref<1x128xf32, #tpu.memory_space<vmem>>, %arg4: memref<8x8x128xf32, #tpu.memory_space<vmem>>) attributes {dimension_semantics = [#tpu.dimension_semantics<parallel>], iteration_bounds = array<i64: 1>, scalar_prefetch = 0 : i64, scratch_operands = 0 : i64, tpu.core_type = #tpu.core_type<tc>, window_params = [{transform_indices = @transform_0, window_bounds = array<i64: 8, 8, 128>}, {pipeline_mode = #tpu.pipeline_mode<synchronous>, transform_indices = @transform_1, window_bounds = array<i64: 128, 128>}, {pipeline_mode = #tpu.pipeline_mode<synchronous>, transform_indices = @transform_2, window_bounds = array<i64: 1, 128>}, {transform_indices = @transform_3, window_bounds = array<i64: 8, 8, 128>}]} {
    %c0 = arith.constant 0 : index
    %c0_0 = arith.constant 0 : index
    %c0_1 = arith.constant 0 : index
    %0 = vector.load %arg1[%c0, %c0_0, %c0_1] : memref<8x8x128xbf16, #tpu.memory_space<vmem>>, vector<8x8x128xbf16>
    %1 = vector.shape_cast %0 : vector<8x8x128xbf16> to vector<64x128xbf16>
    %c0_2 = arith.constant 0 : index
    %c0_3 = arith.constant 0 : index
    %2 = vector.load %arg2[%c0_2, %c0_3] : memref<128x128xbf16, #tpu.memory_space<vmem>>, vector<128x128xbf16>
    %cst = arith.constant dense<0.000000e+00> : vector<64x128xf32>
    %3 = tpu.matmul %1, %2, %cst {dimension_numbers = #tpu.dot_dimension_numbers<[1], [0], [0], [1], [0, 0, 1, 1], [], []>} : vector<64x128xbf16>, vector<128x128xbf16>, vector<64x128xf32> -> vector<64x128xf32>
    %c0_4 = arith.constant 0 : index
    %c0_5 = arith.constant 0 : index
    %4 = vector.load %arg3[%c0_4, %c0_5] : memref<1x128xf32, #tpu.memory_space<vmem>>, vector<1x128xf32>
    %5 = vector.shape_cast %4 : vector<1x128xf32> to vector<1x128xf32>
    %6 = vector.broadcast %5 : vector<1x128xf32> to vector<64x128xf32>
    %7 = arith.addf %3, %6 : vector<64x128xf32>
    %8 = vector.shape_cast %7 : vector<64x128xf32> to vector<8x8x128xf32>
    %c0_6 = arith.constant 0 : index
    %c0_7 = arith.constant 0 : index
    %c0_8 = arith.constant 0 : index
    %9 = vector.load %arg4[%c0_6, %c0_7, %c0_8] : memref<8x8x128xf32, #tpu.memory_space<vmem>>, vector<8x8x128xf32>
    tpu.vector_store %arg4[%c0_6, %c0_7, %c0_8], %8 {strides = array<i32>} : memref<8x8x128xf32, #tpu.memory_space<vmem>>, vector<8x8x128xf32>,
    return
  }
  func.func @transform_0(%arg0: i32) -> (i32, i32, i32) {
    %c0_i32 = arith.constant 0 : i32
    %c0_i32_0 = arith.constant 0 : i32
    %c0_i32_1 = arith.constant 0 : i32
    return %arg0, %c0_i32, %c0_i32_0 : i32, i32, i32
  }
  func.func @transform_1(%arg0: i32) -> (i32, i32) {
    %c0_i32 = arith.constant 0 : i32
    %c0_i32_0 = arith.constant 0 : i32
    %c0_i32_1 = arith.constant 0 : i32
    return %c0_i32, %c0_i32_0 : i32, i32
  }
  func.func @transform_2(%arg0: i32) -> (i32, i32) {
    %c0_i32 = arith.constant 0 : i32
    %c0_i32_0 = arith.constant 0 : i32
    %c0_i32_1 = arith.constant 0 : i32
    return %c0_i32, %c0_i32_0 : i32, i32
  }
  func.func @transform_3(%arg0: i32) -> (i32, i32, i32) {
    %c0_i32 = arith.constant 0 : i32
    %c0_i32_0 = arith.constant 0 : i32
    %c0_i32_1 = arith.constant 0 : i32
    return %arg0, %c0_i32, %c0_i32_0 : i32, i32, i32
  }
}

module attributes {stable_mosaic.version = 11 : i64} {
  func.func @lstm_recurrence_kernel(%arg0: memref<8x8x32xbf16, #tpu.memory_space<vmem>>, %arg1: memref<32x512xbf16, #tpu.memory_space<vmem>>, %arg2: memref<128x512xbf16, #tpu.memory_space<vmem>>, %arg3: memref<1x512xf32, #tpu.memory_space<vmem>>, %arg4: memref<8x8x128xbf16, #tpu.memory_space<vmem>>, %arg5: memref<8x8x512xf32, #tpu.memory_space<vmem>>) attributes {dimension_semantics = [], scalar_prefetch = 0 : i64, scratch_operands = 1 : i64, tpu.core_type = #tpu.core_type<tc>} {
    %c0 = arith.constant 0 : index
    %c0_0 = arith.constant 0 : index
    %0 = vector.load %arg2[%c0, %c0_0] : memref<128x512xbf16, #tpu.memory_space<vmem>>, vector<128x512xbf16>
    %c0_1 = arith.constant 0 : index
    %c0_2 = arith.constant 0 : index
    %c0_3 = arith.constant 0 : index
    %1 = vector.load %arg0[%c0_1, %c0_2, %c0_3] : memref<8x8x32xbf16, #tpu.memory_space<vmem>>, vector<8x8x32xbf16>
    %2 = vector.shape_cast %1 : vector<8x8x32xbf16> to vector<64x32xbf16>
    %c0_4 = arith.constant 0 : index
    %c0_5 = arith.constant 0 : index
    %3 = vector.load %arg1[%c0_4, %c0_5] : memref<32x512xbf16, #tpu.memory_space<vmem>>, vector<32x512xbf16>
    %cst = arith.constant dense<0.000000e+00> : vector<64x512xf32>
    %4 = tpu.matmul %2, %3, %cst {dimension_numbers = #tpu.dot_dimension_numbers<[1], [0], [0], [1], [0, 0, 1, 1], [], []>} : vector<64x32xbf16>, vector<32x512xbf16>, vector<64x512xf32> -> vector<64x512xf32>
    %c0_6 = arith.constant 0 : index
    %c0_7 = arith.constant 0 : index
    %5 = vector.load %arg3[%c0_6, %c0_7] : memref<1x512xf32, #tpu.memory_space<vmem>>, vector<1x512xf32>
    %6 = vector.shape_cast %5 : vector<1x512xf32> to vector<1x512xf32>
    %7 = vector.broadcast %6 : vector<1x512xf32> to vector<64x512xf32>
    %8 = arith.addf %4, %7 : vector<64x512xf32>
    %9 = vector.shape_cast %8 : vector<64x512xf32> to vector<8x8x512xf32>
    %c0_8 = arith.constant 0 : index
    %c0_9 = arith.constant 0 : index
    %c0_10 = arith.constant 0 : index
    %10 = vector.load %arg5[%c0_8, %c0_9, %c0_10] : memref<8x8x512xf32, #tpu.memory_space<vmem>>, vector<8x8x512xf32>
    tpu.vector_store %arg5[%c0_8, %c0_9, %c0_10], %9 {strides = array<i32>} : memref<8x8x512xf32, #tpu.memory_space<vmem>>, vector<8x8x512xf32>,
    %cst_11 = arith.constant 0.000000e+00 : f32
    %11 = vector.broadcast %cst_11 : f32 to vector<8x128xf32>
    %c0_12 = arith.constant 0 : index
    %c0_13 = arith.constant 0 : index
    %c0_14 = arith.constant 0 : index
    %12 = vector.load %arg5[%c0_12, %c0_13, %c0_14] : memref<8x8x512xf32, #tpu.memory_space<vmem>>, vector<1x8x512xf32>
    %13 = vector.shape_cast %12 : vector<1x8x512xf32> to vector<8x512xf32>
    %14 = vector.extract_strided_slice %13 {offsets = [0, 0], sizes = [8, 128], strides = [1, 1]} : vector<8x512xf32> to vector<8x128xf32>
    %15 = arith.negf %14 : vector<8x128xf32>
    %16 = math.exp %15 : vector<8x128xf32>
    %cst_15 = arith.constant 1.000000e+00 : f32
    %17 = vector.broadcast %cst_15 : f32 to vector<8x128xf32>
    %18 = arith.addf %17, %16 : vector<8x128xf32>
    %19 = arith.divf %17, %18 : vector<8x128xf32>
    %20 = vector.extract_strided_slice %13 {offsets = [0, 128], sizes = [8, 128], strides = [1, 1]} : vector<8x512xf32> to vector<8x128xf32>
    %21 = arith.negf %20 : vector<8x128xf32>
    %22 = math.exp %21 : vector<8x128xf32>
    %cst_16 = arith.constant 1.000000e+00 : f32
    %23 = vector.broadcast %cst_16 : f32 to vector<8x128xf32>
    %24 = arith.addf %23, %22 : vector<8x128xf32>
    %25 = arith.divf %23, %24 : vector<8x128xf32>
    %26 = vector.extract_strided_slice %13 {offsets = [0, 256], sizes = [8, 128], strides = [1, 1]} : vector<8x512xf32> to vector<8x128xf32>
    %27 = math.tanh %26 : vector<8x128xf32>
    %28 = vector.extract_strided_slice %13 {offsets = [0, 384], sizes = [8, 128], strides = [1, 1]} : vector<8x512xf32> to vector<8x128xf32>
    %29 = arith.negf %28 : vector<8x128xf32>
    %30 = math.exp %29 : vector<8x128xf32>
    %cst_17 = arith.constant 1.000000e+00 : f32
    %31 = vector.broadcast %cst_17 : f32 to vector<8x128xf32>
    %32 = arith.addf %31, %30 : vector<8x128xf32>
    %33 = arith.divf %31, %32 : vector<8x128xf32>
    %34 = arith.mulf %25, %11 : vector<8x128xf32>
    %35 = arith.mulf %19, %27 : vector<8x128xf32>
    %36 = arith.addf %34, %35 : vector<8x128xf32>
    %37 = math.tanh %36 : vector<8x128xf32>
    %38 = arith.mulf %33, %37 : vector<8x128xf32>
    %39 = arith.truncf %38 : vector<8x128xf32> to vector<8x128xbf16>
    %c0_18 = arith.constant 0 : index
    %c0_19 = arith.constant 0 : index
    %c0_20 = arith.constant 0 : index
    %40 = vector.load %arg4[%c0_18, %c0_19, %c0_20] : memref<8x8x128xbf16, #tpu.memory_space<vmem>>, vector<1x8x128xbf16>
    %41 = vector.shape_cast %40 : vector<1x8x128xbf16> to vector<8x128xbf16>
    %42 = vector.shape_cast %39 : vector<8x128xbf16> to vector<1x8x128xbf16>
    tpu.vector_store %arg4[%c0_18, %c0_19, %c0_20], %42 {strides = array<i32>} : memref<8x8x128xbf16, #tpu.memory_space<vmem>>, vector<1x8x128xbf16>,
    %c1 = arith.constant 1 : index
    %c0_21 = arith.constant 0 : index
    %c0_22 = arith.constant 0 : index
    %43 = vector.load %arg5[%c1, %c0_21, %c0_22] : memref<8x8x512xf32, #tpu.memory_space<vmem>>, vector<1x8x512xf32>
    %44 = vector.shape_cast %43 : vector<1x8x512xf32> to vector<8x512xf32>
    %cst_23 = arith.constant dense<0.000000e+00> : vector<8x512xf32>
    %45 = tpu.matmul %39, %0, %cst_23 {dimension_numbers = #tpu.dot_dimension_numbers<[1], [0], [0], [1], [0, 0, 1, 1], [], []>} : vector<8x128xbf16>, vector<128x512xbf16>, vector<8x512xf32> -> vector<8x512xf32>
    %46 = arith.addf %44, %45 : vector<8x512xf32>
    %47 = vector.extract_strided_slice %46 {offsets = [0, 0], sizes = [8, 128], strides = [1, 1]} : vector<8x512xf32> to vector<8x128xf32>
    %48 = arith.negf %47 : vector<8x128xf32>
    %49 = math.exp %48 : vector<8x128xf32>
    %cst_24 = arith.constant 1.000000e+00 : f32
    %50 = vector.broadcast %cst_24 : f32 to vector<8x128xf32>
    %51 = arith.addf %50, %49 : vector<8x128xf32>
    %52 = arith.divf %50, %51 : vector<8x128xf32>
    %53 = vector.extract_strided_slice %46 {offsets = [0, 128], sizes = [8, 128], strides = [1, 1]} : vector<8x512xf32> to vector<8x128xf32>
    %54 = arith.negf %53 : vector<8x128xf32>
    %55 = math.exp %54 : vector<8x128xf32>
    %cst_25 = arith.constant 1.000000e+00 : f32
    %56 = vector.broadcast %cst_25 : f32 to vector<8x128xf32>
    %57 = arith.addf %56, %55 : vector<8x128xf32>
    %58 = arith.divf %56, %57 : vector<8x128xf32>
    %59 = vector.extract_strided_slice %46 {offsets = [0, 256], sizes = [8, 128], strides = [1, 1]} : vector<8x512xf32> to vector<8x128xf32>
    %60 = math.tanh %59 : vector<8x128xf32>
    %61 = vector.extract_strided_slice %46 {offsets = [0, 384], sizes = [8, 128], strides = [1, 1]} : vector<8x512xf32> to vector<8x128xf32>
    %62 = arith.negf %61 : vector<8x128xf32>
    %63 = math.exp %62 : vector<8x128xf32>
    %cst_26 = arith.constant 1.000000e+00 : f32
    %64 = vector.broadcast %cst_26 : f32 to vector<8x128xf32>
    %65 = arith.addf %64, %63 : vector<8x128xf32>
    %66 = arith.divf %64, %65 : vector<8x128xf32>
    %67 = arith.mulf %58, %36 : vector<8x128xf32>
    %68 = arith.mulf %52, %60 : vector<8x128xf32>
    %69 = arith.addf %67, %68 : vector<8x128xf32>
    %70 = math.tanh %69 : vector<8x128xf32>
    %71 = arith.mulf %66, %70 : vector<8x128xf32>
    %72 = arith.truncf %71 : vector<8x128xf32> to vector<8x128xbf16>
    %c1_27 = arith.constant 1 : index
    %c0_28 = arith.constant 0 : index
    %c0_29 = arith.constant 0 : index
    %73 = vector.load %arg4[%c1_27, %c0_28, %c0_29] : memref<8x8x128xbf16, #tpu.memory_space<vmem>>, vector<1x8x128xbf16>
    %74 = vector.shape_cast %73 : vector<1x8x128xbf16> to vector<8x128xbf16>
    %75 = vector.shape_cast %72 : vector<8x128xbf16> to vector<1x8x128xbf16>
    tpu.vector_store %arg4[%c1_27, %c0_28, %c0_29], %75 {strides = array<i32>} : memref<8x8x128xbf16, #tpu.memory_space<vmem>>, vector<1x8x128xbf16>,
    %c2 = arith.constant 2 : index
    %c0_30 = arith.constant 0 : index
    %c0_31 = arith.constant 0 : index
    %76 = vector.load %arg5[%c2, %c0_30, %c0_31] : memref<8x8x512xf32, #tpu.memory_space<vmem>>, vector<1x8x512xf32>
    %77 = vector.shape_cast %76 : vector<1x8x512xf32> to vector<8x512xf32>
    %cst_32 = arith.constant dense<0.000000e+00> : vector<8x512xf32>
    %78 = tpu.matmul %72, %0, %cst_32 {dimension_numbers = #tpu.dot_dimension_numbers<[1], [0], [0], [1], [0, 0, 1, 1], [], []>} : vector<8x128xbf16>, vector<128x512xbf16>, vector<8x512xf32> -> vector<8x512xf32>
    %79 = arith.addf %77, %78 : vector<8x512xf32>
    %80 = vector.extract_strided_slice %79 {offsets = [0, 0], sizes = [8, 128], strides = [1, 1]} : vector<8x512xf32> to vector<8x128xf32>
    %81 = arith.negf %80 : vector<8x128xf32>
    %82 = math.exp %81 : vector<8x128xf32>
    %cst_33 = arith.constant 1.000000e+00 : f32
    %83 = vector.broadcast %cst_33 : f32 to vector<8x128xf32>
    %84 = arith.addf %83, %82 : vector<8x128xf32>
    %85 = arith.divf %83, %84 : vector<8x128xf32>
    %86 = vector.extract_strided_slice %79 {offsets = [0, 128], sizes = [8, 128], strides = [1, 1]} : vector<8x512xf32> to vector<8x128xf32>
    %87 = arith.negf %86 : vector<8x128xf32>
    %88 = math.exp %87 : vector<8x128xf32>
    %cst_34 = arith.constant 1.000000e+00 : f32
    %89 = vector.broadcast %cst_34 : f32 to vector<8x128xf32>
    %90 = arith.addf %89, %88 : vector<8x128xf32>
    %91 = arith.divf %89, %90 : vector<8x128xf32>
    %92 = vector.extract_strided_slice %79 {offsets = [0, 256], sizes = [8, 128], strides = [1, 1]} : vector<8x512xf32> to vector<8x128xf32>
    %93 = math.tanh %92 : vector<8x128xf32>
    %94 = vector.extract_strided_slice %79 {offsets = [0, 384], sizes = [8, 128], strides = [1, 1]} : vector<8x512xf32> to vector<8x128xf32>
    %95 = arith.negf %94 : vector<8x128xf32>
    %96 = math.exp %95 : vector<8x128xf32>
    %cst_35 = arith.constant 1.000000e+00 : f32
    %97 = vector.broadcast %cst_35 : f32 to vector<8x128xf32>
    %98 = arith.addf %97, %96 : vector<8x128xf32>
    %99 = arith.divf %97, %98 : vector<8x128xf32>
    %100 = arith.mulf %91, %69 : vector<8x128xf32>
    %101 = arith.mulf %85, %93 : vector<8x128xf32>
    %102 = arith.addf %100, %101 : vector<8x128xf32>
    %103 = math.tanh %102 : vector<8x128xf32>
    %104 = arith.mulf %99, %103 : vector<8x128xf32>
    %105 = arith.truncf %104 : vector<8x128xf32> to vector<8x128xbf16>
    %c2_36 = arith.constant 2 : index
    %c0_37 = arith.constant 0 : index
    %c0_38 = arith.constant 0 : index
    %106 = vector.load %arg4[%c2_36, %c0_37, %c0_38] : memref<8x8x128xbf16, #tpu.memory_space<vmem>>, vector<1x8x128xbf16>
    %107 = vector.shape_cast %106 : vector<1x8x128xbf16> to vector<8x128xbf16>
    %108 = vector.shape_cast %105 : vector<8x128xbf16> to vector<1x8x128xbf16>
    tpu.vector_store %arg4[%c2_36, %c0_37, %c0_38], %108 {strides = array<i32>} : memref<8x8x128xbf16, #tpu.memory_space<vmem>>, vector<1x8x128xbf16>,
    %c3 = arith.constant 3 : index
    %c0_39 = arith.constant 0 : index
    %c0_40 = arith.constant 0 : index
    %109 = vector.load %arg5[%c3, %c0_39, %c0_40] : memref<8x8x512xf32, #tpu.memory_space<vmem>>, vector<1x8x512xf32>
    %110 = vector.shape_cast %109 : vector<1x8x512xf32> to vector<8x512xf32>
    %cst_41 = arith.constant dense<0.000000e+00> : vector<8x512xf32>
    %111 = tpu.matmul %105, %0, %cst_41 {dimension_numbers = #tpu.dot_dimension_numbers<[1], [0], [0], [1], [0, 0, 1, 1], [], []>} : vector<8x128xbf16>, vector<128x512xbf16>, vector<8x512xf32> -> vector<8x512xf32>
    %112 = arith.addf %110, %111 : vector<8x512xf32>
    %113 = vector.extract_strided_slice %112 {offsets = [0, 0], sizes = [8, 128], strides = [1, 1]} : vector<8x512xf32> to vector<8x128xf32>
    %114 = arith.negf %113 : vector<8x128xf32>
    %115 = math.exp %114 : vector<8x128xf32>
    %cst_42 = arith.constant 1.000000e+00 : f32
    %116 = vector.broadcast %cst_42 : f32 to vector<8x128xf32>
    %117 = arith.addf %116, %115 : vector<8x128xf32>
    %118 = arith.divf %116, %117 : vector<8x128xf32>
    %119 = vector.extract_strided_slice %112 {offsets = [0, 128], sizes = [8, 128], strides = [1, 1]} : vector<8x512xf32> to vector<8x128xf32>
    %120 = arith.negf %119 : vector<8x128xf32>
    %121 = math.exp %120 : vector<8x128xf32>
    %cst_43 = arith.constant 1.000000e+00 : f32
    %122 = vector.broadcast %cst_43 : f32 to vector<8x128xf32>
    %123 = arith.addf %122, %121 : vector<8x128xf32>
    %124 = arith.divf %122, %123 : vector<8x128xf32>
    %125 = vector.extract_strided_slice %112 {offsets = [0, 256], sizes = [8, 128], strides = [1, 1]} : vector<8x512xf32> to vector<8x128xf32>
    %126 = math.tanh %125 : vector<8x128xf32>
    %127 = vector.extract_strided_slice %112 {offsets = [0, 384], sizes = [8, 128], strides = [1, 1]} : vector<8x512xf32> to vector<8x128xf32>
    %128 = arith.negf %127 : vector<8x128xf32>
    %129 = math.exp %128 : vector<8x128xf32>
    %cst_44 = arith.constant 1.000000e+00 : f32
    %130 = vector.broadcast %cst_44 : f32 to vector<8x128xf32>
    %131 = arith.addf %130, %129 : vector<8x128xf32>
    %132 = arith.divf %130, %131 : vector<8x128xf32>
    %133 = arith.mulf %124, %102 : vector<8x128xf32>
    %134 = arith.mulf %118, %126 : vector<8x128xf32>
    %135 = arith.addf %133, %134 : vector<8x128xf32>
    %136 = math.tanh %135 : vector<8x128xf32>
    %137 = arith.mulf %132, %136 : vector<8x128xf32>
    %138 = arith.truncf %137 : vector<8x128xf32> to vector<8x128xbf16>
    %c3_45 = arith.constant 3 : index
    %c0_46 = arith.constant 0 : index
    %c0_47 = arith.constant 0 : index
    %139 = vector.load %arg4[%c3_45, %c0_46, %c0_47] : memref<8x8x128xbf16, #tpu.memory_space<vmem>>, vector<1x8x128xbf16>
    %140 = vector.shape_cast %139 : vector<1x8x128xbf16> to vector<8x128xbf16>
    %141 = vector.shape_cast %138 : vector<8x128xbf16> to vector<1x8x128xbf16>
    tpu.vector_store %arg4[%c3_45, %c0_46, %c0_47], %141 {strides = array<i32>} : memref<8x8x128xbf16, #tpu.memory_space<vmem>>, vector<1x8x128xbf16>,
    %c4 = arith.constant 4 : index
    %c0_48 = arith.constant 0 : index
    %c0_49 = arith.constant 0 : index
    %142 = vector.load %arg5[%c4, %c0_48, %c0_49] : memref<8x8x512xf32, #tpu.memory_space<vmem>>, vector<1x8x512xf32>
    %143 = vector.shape_cast %142 : vector<1x8x512xf32> to vector<8x512xf32>
    %cst_50 = arith.constant dense<0.000000e+00> : vector<8x512xf32>
    %144 = tpu.matmul %138, %0, %cst_50 {dimension_numbers = #tpu.dot_dimension_numbers<[1], [0], [0], [1], [0, 0, 1, 1], [], []>} : vector<8x128xbf16>, vector<128x512xbf16>, vector<8x512xf32> -> vector<8x512xf32>
    %145 = arith.addf %143, %144 : vector<8x512xf32>
    %146 = vector.extract_strided_slice %145 {offsets = [0, 0], sizes = [8, 128], strides = [1, 1]} : vector<8x512xf32> to vector<8x128xf32>
    %147 = arith.negf %146 : vector<8x128xf32>
    %148 = math.exp %147 : vector<8x128xf32>
    %cst_51 = arith.constant 1.000000e+00 : f32
    %149 = vector.broadcast %cst_51 : f32 to vector<8x128xf32>
    %150 = arith.addf %149, %148 : vector<8x128xf32>
    %151 = arith.divf %149, %150 : vector<8x128xf32>
    %152 = vector.extract_strided_slice %145 {offsets = [0, 128], sizes = [8, 128], strides = [1, 1]} : vector<8x512xf32> to vector<8x128xf32>
    %153 = arith.negf %152 : vector<8x128xf32>
    %154 = math.exp %153 : vector<8x128xf32>
    %cst_52 = arith.constant 1.000000e+00 : f32
    %155 = vector.broadcast %cst_52 : f32 to vector<8x128xf32>
    %156 = arith.addf %155, %154 : vector<8x128xf32>
    %157 = arith.divf %155, %156 : vector<8x128xf32>
    %158 = vector.extract_strided_slice %145 {offsets = [0, 256], sizes = [8, 128], strides = [1, 1]} : vector<8x512xf32> to vector<8x128xf32>
    %159 = math.tanh %158 : vector<8x128xf32>
    %160 = vector.extract_strided_slice %145 {offsets = [0, 384], sizes = [8, 128], strides = [1, 1]} : vector<8x512xf32> to vector<8x128xf32>
    %161 = arith.negf %160 : vector<8x128xf32>
    %162 = math.exp %161 : vector<8x128xf32>
    %cst_53 = arith.constant 1.000000e+00 : f32
    %163 = vector.broadcast %cst_53 : f32 to vector<8x128xf32>
    %164 = arith.addf %163, %162 : vector<8x128xf32>
    %165 = arith.divf %163, %164 : vector<8x128xf32>
    %166 = arith.mulf %157, %135 : vector<8x128xf32>
    %167 = arith.mulf %151, %159 : vector<8x128xf32>
    %168 = arith.addf %166, %167 : vector<8x128xf32>
    %169 = math.tanh %168 : vector<8x128xf32>
    %170 = arith.mulf %165, %169 : vector<8x128xf32>
    %171 = arith.truncf %170 : vector<8x128xf32> to vector<8x128xbf16>
    %c4_54 = arith.constant 4 : index
    %c0_55 = arith.constant 0 : index
    %c0_56 = arith.constant 0 : index
    %172 = vector.load %arg4[%c4_54, %c0_55, %c0_56] : memref<8x8x128xbf16, #tpu.memory_space<vmem>>, vector<1x8x128xbf16>
    %173 = vector.shape_cast %172 : vector<1x8x128xbf16> to vector<8x128xbf16>
    %174 = vector.shape_cast %171 : vector<8x128xbf16> to vector<1x8x128xbf16>
    tpu.vector_store %arg4[%c4_54, %c0_55, %c0_56], %174 {strides = array<i32>} : memref<8x8x128xbf16, #tpu.memory_space<vmem>>, vector<1x8x128xbf16>,
    %c5 = arith.constant 5 : index
    %c0_57 = arith.constant 0 : index
    %c0_58 = arith.constant 0 : index
    %175 = vector.load %arg5[%c5, %c0_57, %c0_58] : memref<8x8x512xf32, #tpu.memory_space<vmem>>, vector<1x8x512xf32>
    %176 = vector.shape_cast %175 : vector<1x8x512xf32> to vector<8x512xf32>
    %cst_59 = arith.constant dense<0.000000e+00> : vector<8x512xf32>
    %177 = tpu.matmul %171, %0, %cst_59 {dimension_numbers = #tpu.dot_dimension_numbers<[1], [0], [0], [1], [0, 0, 1, 1], [], []>} : vector<8x128xbf16>, vector<128x512xbf16>, vector<8x512xf32> -> vector<8x512xf32>
    %178 = arith.addf %176, %177 : vector<8x512xf32>
    %179 = vector.extract_strided_slice %178 {offsets = [0, 0], sizes = [8, 128], strides = [1, 1]} : vector<8x512xf32> to vector<8x128xf32>
    %180 = arith.negf %179 : vector<8x128xf32>
    %181 = math.exp %180 : vector<8x128xf32>
    %cst_60 = arith.constant 1.000000e+00 : f32
    %182 = vector.broadcast %cst_60 : f32 to vector<8x128xf32>
    %183 = arith.addf %182, %181 : vector<8x128xf32>
    %184 = arith.divf %182, %183 : vector<8x128xf32>
    %185 = vector.extract_strided_slice %178 {offsets = [0, 128], sizes = [8, 128], strides = [1, 1]} : vector<8x512xf32> to vector<8x128xf32>
    %186 = arith.negf %185 : vector<8x128xf32>
    %187 = math.exp %186 : vector<8x128xf32>
    %cst_61 = arith.constant 1.000000e+00 : f32
    %188 = vector.broadcast %cst_61 : f32 to vector<8x128xf32>
    %189 = arith.addf %188, %187 : vector<8x128xf32>
    %190 = arith.divf %188, %189 : vector<8x128xf32>
    %191 = vector.extract_strided_slice %178 {offsets = [0, 256], sizes = [8, 128], strides = [1, 1]} : vector<8x512xf32> to vector<8x128xf32>
    %192 = math.tanh %191 : vector<8x128xf32>
    %193 = vector.extract_strided_slice %178 {offsets = [0, 384], sizes = [8, 128], strides = [1, 1]} : vector<8x512xf32> to vector<8x128xf32>
    %194 = arith.negf %193 : vector<8x128xf32>
    %195 = math.exp %194 : vector<8x128xf32>
    %cst_62 = arith.constant 1.000000e+00 : f32
    %196 = vector.broadcast %cst_62 : f32 to vector<8x128xf32>
    %197 = arith.addf %196, %195 : vector<8x128xf32>
    %198 = arith.divf %196, %197 : vector<8x128xf32>
    %199 = arith.mulf %190, %168 : vector<8x128xf32>
    %200 = arith.mulf %184, %192 : vector<8x128xf32>
    %201 = arith.addf %199, %200 : vector<8x128xf32>
    %202 = math.tanh %201 : vector<8x128xf32>
    %203 = arith.mulf %198, %202 : vector<8x128xf32>
    %204 = arith.truncf %203 : vector<8x128xf32> to vector<8x128xbf16>
    %c5_63 = arith.constant 5 : index
    %c0_64 = arith.constant 0 : index
    %c0_65 = arith.constant 0 : index
    %205 = vector.load %arg4[%c5_63, %c0_64, %c0_65] : memref<8x8x128xbf16, #tpu.memory_space<vmem>>, vector<1x8x128xbf16>
    %206 = vector.shape_cast %205 : vector<1x8x128xbf16> to vector<8x128xbf16>
    %207 = vector.shape_cast %204 : vector<8x128xbf16> to vector<1x8x128xbf16>
    tpu.vector_store %arg4[%c5_63, %c0_64, %c0_65], %207 {strides = array<i32>} : memref<8x8x128xbf16, #tpu.memory_space<vmem>>, vector<1x8x128xbf16>,
    %c6 = arith.constant 6 : index
    %c0_66 = arith.constant 0 : index
    %c0_67 = arith.constant 0 : index
    %208 = vector.load %arg5[%c6, %c0_66, %c0_67] : memref<8x8x512xf32, #tpu.memory_space<vmem>>, vector<1x8x512xf32>
    %209 = vector.shape_cast %208 : vector<1x8x512xf32> to vector<8x512xf32>
    %cst_68 = arith.constant dense<0.000000e+00> : vector<8x512xf32>
    %210 = tpu.matmul %204, %0, %cst_68 {dimension_numbers = #tpu.dot_dimension_numbers<[1], [0], [0], [1], [0, 0, 1, 1], [], []>} : vector<8x128xbf16>, vector<128x512xbf16>, vector<8x512xf32> -> vector<8x512xf32>
    %211 = arith.addf %209, %210 : vector<8x512xf32>
    %212 = vector.extract_strided_slice %211 {offsets = [0, 0], sizes = [8, 128], strides = [1, 1]} : vector<8x512xf32> to vector<8x128xf32>
    %213 = arith.negf %212 : vector<8x128xf32>
    %214 = math.exp %213 : vector<8x128xf32>
    %cst_69 = arith.constant 1.000000e+00 : f32
    %215 = vector.broadcast %cst_69 : f32 to vector<8x128xf32>
    %216 = arith.addf %215, %214 : vector<8x128xf32>
    %217 = arith.divf %215, %216 : vector<8x128xf32>
    %218 = vector.extract_strided_slice %211 {offsets = [0, 128], sizes = [8, 128], strides = [1, 1]} : vector<8x512xf32> to vector<8x128xf32>
    %219 = arith.negf %218 : vector<8x128xf32>
    %220 = math.exp %219 : vector<8x128xf32>
    %cst_70 = arith.constant 1.000000e+00 : f32
    %221 = vector.broadcast %cst_70 : f32 to vector<8x128xf32>
    %222 = arith.addf %221, %220 : vector<8x128xf32>
    %223 = arith.divf %221, %222 : vector<8x128xf32>
    %224 = vector.extract_strided_slice %211 {offsets = [0, 256], sizes = [8, 128], strides = [1, 1]} : vector<8x512xf32> to vector<8x128xf32>
    %225 = math.tanh %224 : vector<8x128xf32>
    %226 = vector.extract_strided_slice %211 {offsets = [0, 384], sizes = [8, 128], strides = [1, 1]} : vector<8x512xf32> to vector<8x128xf32>
    %227 = arith.negf %226 : vector<8x128xf32>
    %228 = math.exp %227 : vector<8x128xf32>
    %cst_71 = arith.constant 1.000000e+00 : f32
    %229 = vector.broadcast %cst_71 : f32 to vector<8x128xf32>
    %230 = arith.addf %229, %228 : vector<8x128xf32>
    %231 = arith.divf %229, %230 : vector<8x128xf32>
    %232 = arith.mulf %223, %201 : vector<8x128xf32>
    %233 = arith.mulf %217, %225 : vector<8x128xf32>
    %234 = arith.addf %232, %233 : vector<8x128xf32>
    %235 = math.tanh %234 : vector<8x128xf32>
    %236 = arith.mulf %231, %235 : vector<8x128xf32>
    %237 = arith.truncf %236 : vector<8x128xf32> to vector<8x128xbf16>
    %c6_72 = arith.constant 6 : index
    %c0_73 = arith.constant 0 : index
    %c0_74 = arith.constant 0 : index
    %238 = vector.load %arg4[%c6_72, %c0_73, %c0_74] : memref<8x8x128xbf16, #tpu.memory_space<vmem>>, vector<1x8x128xbf16>
    %239 = vector.shape_cast %238 : vector<1x8x128xbf16> to vector<8x128xbf16>
    %240 = vector.shape_cast %237 : vector<8x128xbf16> to vector<1x8x128xbf16>
    tpu.vector_store %arg4[%c6_72, %c0_73, %c0_74], %240 {strides = array<i32>} : memref<8x8x128xbf16, #tpu.memory_space<vmem>>, vector<1x8x128xbf16>,
    %c7 = arith.constant 7 : index
    %c0_75 = arith.constant 0 : index
    %c0_76 = arith.constant 0 : index
    %241 = vector.load %arg5[%c7, %c0_75, %c0_76] : memref<8x8x512xf32, #tpu.memory_space<vmem>>, vector<1x8x512xf32>
    %242 = vector.shape_cast %241 : vector<1x8x512xf32> to vector<8x512xf32>
    %cst_77 = arith.constant dense<0.000000e+00> : vector<8x512xf32>
    %243 = tpu.matmul %237, %0, %cst_77 {dimension_numbers = #tpu.dot_dimension_numbers<[1], [0], [0], [1], [0, 0, 1, 1], [], []>} : vector<8x128xbf16>, vector<128x512xbf16>, vector<8x512xf32> -> vector<8x512xf32>
    %244 = arith.addf %242, %243 : vector<8x512xf32>
    %245 = vector.extract_strided_slice %244 {offsets = [0, 0], sizes = [8, 128], strides = [1, 1]} : vector<8x512xf32> to vector<8x128xf32>
    %246 = arith.negf %245 : vector<8x128xf32>
    %247 = math.exp %246 : vector<8x128xf32>
    %cst_78 = arith.constant 1.000000e+00 : f32
    %248 = vector.broadcast %cst_78 : f32 to vector<8x128xf32>
    %249 = arith.addf %248, %247 : vector<8x128xf32>
    %250 = arith.divf %248, %249 : vector<8x128xf32>
    %251 = vector.extract_strided_slice %244 {offsets = [0, 128], sizes = [8, 128], strides = [1, 1]} : vector<8x512xf32> to vector<8x128xf32>
    %252 = arith.negf %251 : vector<8x128xf32>
    %253 = math.exp %252 : vector<8x128xf32>
    %cst_79 = arith.constant 1.000000e+00 : f32
    %254 = vector.broadcast %cst_79 : f32 to vector<8x128xf32>
    %255 = arith.addf %254, %253 : vector<8x128xf32>
    %256 = arith.divf %254, %255 : vector<8x128xf32>
    %257 = vector.extract_strided_slice %244 {offsets = [0, 256], sizes = [8, 128], strides = [1, 1]} : vector<8x512xf32> to vector<8x128xf32>
    %258 = math.tanh %257 : vector<8x128xf32>
    %259 = vector.extract_strided_slice %244 {offsets = [0, 384], sizes = [8, 128], strides = [1, 1]} : vector<8x512xf32> to vector<8x128xf32>
    %260 = arith.negf %259 : vector<8x128xf32>
    %261 = math.exp %260 : vector<8x128xf32>
    %cst_80 = arith.constant 1.000000e+00 : f32
    %262 = vector.broadcast %cst_80 : f32 to vector<8x128xf32>
    %263 = arith.addf %262, %261 : vector<8x128xf32>
    %264 = arith.divf %262, %263 : vector<8x128xf32>
    %265 = arith.mulf %256, %234 : vector<8x128xf32>
    %266 = arith.mulf %250, %258 : vector<8x128xf32>
    %267 = arith.addf %265, %266 : vector<8x128xf32>
    %268 = math.tanh %267 : vector<8x128xf32>
    %269 = arith.mulf %264, %268 : vector<8x128xf32>
    %270 = arith.truncf %269 : vector<8x128xf32> to vector<8x128xbf16>
    %c7_81 = arith.constant 7 : index
    %c0_82 = arith.constant 0 : index
    %c0_83 = arith.constant 0 : index
    %271 = vector.load %arg4[%c7_81, %c0_82, %c0_83] : memref<8x8x128xbf16, #tpu.memory_space<vmem>>, vector<1x8x128xbf16>
    %272 = vector.shape_cast %271 : vector<1x8x128xbf16> to vector<8x128xbf16>
    %273 = vector.shape_cast %270 : vector<8x128xbf16> to vector<1x8x128xbf16>
    tpu.vector_store %arg4[%c7_81, %c0_82, %c0_83], %273 {strides = array<i32>} : memref<8x8x128xbf16, #tpu.memory_space<vmem>>, vector<1x8x128xbf16>,
    return
  }
}

</mosaic_0001>

<llo_original>
// kernel: decoder_rnn_forward.3
$region0: #{decoder_rnn_forward.3}
  #allocation0 [shape = 'u32[]', space=smem, size = 0x4, offset = 0x4, fixed_abs, tag = 'smem constant byte address 0x4 - core index']
  #allocation1 [shape = 'u32[72,128]{1,0:T(1,128)}', space=vmem, size = 0x9000, scoped, tag = 'internal scratch']
  %s0 = inlined_call_operand.vmem [shape: bf16[8,8,128], index: 0, kind: input, shape index: {}]
  %s1 = inlined_call_operand.vmem [shape: bf16[128,128], index: 1, kind: input, shape index: {}]
  %s2 = inlined_call_operand.vmem [shape: f32[1,128], index: 2, kind: input, shape index: {}]
  %s3 = inlined_call_operand.vmem [shape: f32[8,8,128], index: 3, kind: output, shape index: {}]
  %s4 = sld [smem:[#allocation0]]
  $region22: #{decoder_rnn_forward.3} parent=0
    _
  %s6 = ssub.s32 1, %s4
  %s7 = scalar_select 0, %s6, %s4
  // Predicated region
  $region2: #{decoder_rnn_forward.3} parent=0 // pred_check
    _
  $region3: #{decoder_rnn_forward.3} parent=0 // pred_check_branch
    %9 = sbr.rel (0) target = $region5
  $region4: #{decoder_rnn_forward.3} parent=0 // pred_region
    _
  $region5: #{decoder_rnn_forward.3} parent=0 // pred_fallthru
    _
  // Predicated region
  $region6: #{decoder_rnn_forward.3} parent=0 // pred_check
    _
  $region7: #{decoder_rnn_forward.3} parent=0 // pred_check_branch
    %11 = sbr.rel (0) target = $region9
  $region8: #{decoder_rnn_forward.3} parent=0 // pred_region
    _
  $region9: #{decoder_rnn_forward.3} parent=0 // pred_fallthru
    _
  // Predicated region
  $region10: #{decoder_rnn_forward.3} parent=0 // pred_check
    _
  $region11: #{decoder_rnn_forward.3} parent=0 // pred_check_branch
    %13 = sbr.rel (0) target = $region13
  $region12: #{decoder_rnn_forward.3} parent=0 // pred_region
    _
  $region13: #{decoder_rnn_forward.3} parent=0 // pred_fallthru
    _
  %v14 = vld [vmem:[%s0] sm:$0xf]
  %v15 = vld [vmem:[%s0 + $0x4] sm:$0xf]
  %v16 = vld [vmem:[%s0 + $0x8] sm:$0xf]
  %v17 = vld [vmem:[%s0 + $0xc] sm:$0xf]
  %v18 = vld [vmem:[%s0 + $0x10] sm:$0xf]
  %v19 = vld [vmem:[%s0 + $0x14] sm:$0xf]
  %v20 = vld [vmem:[%s0 + $0x18] sm:$0xf]
  %v21 = vld [vmem:[%s0 + $0x1c] sm:$0xf]
  %v22 = vld [vmem:[%s1] sm:$0xf]
  %v23 = vld [vmem:[%s1 + $0x4] sm:$0xf]
  %v24 = vld [vmem:[%s1 + $0x8] sm:$0xf]
  %v25 = vld [vmem:[%s1 + $0xc] sm:$0xf]
  %v26 = vld [vmem:[%s1 + $0x10] sm:$0xf]
  %v27 = vld [vmem:[%s1 + $0x14] sm:$0xf]
  %v28 = vld [vmem:[%s1 + $0x18] sm:$0xf]
  %v29 = vld [vmem:[%s1 + $0x1c] sm:$0xf]
  %v30 = vld [vmem:[%s1 + $0x20] sm:$0xf]
  %v31 = vld [vmem:[%s1 + $0x24] sm:$0xf]
  %v32 = vld [vmem:[%s1 + $0x28] sm:$0xf]
  %v33 = vld [vmem:[%s1 + $0x2c] sm:$0xf]
  %v34 = vld [vmem:[%s1 + $0x30] sm:$0xf]
  %v35 = vld [vmem:[%s1 + $0x34] sm:$0xf]
  %v36 = vld [vmem:[%s1 + $0x38] sm:$0xf]
  %v37 = vld [vmem:[%s1 + $0x3c] sm:$0xf]
  %v38 = vld [vmem:[%s2] sm:$0x1]
  %v40 = vperm.slane %v38, 0
  %v50 = vunpack.c.l.b16 %v14
  %v51 = vunpack.c.l.b16 %v15
  %v52 = vunpack.c.l.b16 %v16
  %v53 = vunpack.c.l.b16 %v17
  %v54 = vunpack.c.l.b16 %v18
  %v55 = vunpack.c.l.b16 %v19
  %v56 = vunpack.c.l.b16 %v20
  %v57 = vunpack.c.l.b16 %v21
  %v58 = vpack.c.b16 %v51, %v50
  %v59 = vpack.c.b16 %v53, %v52
  %v60 = vpack.c.b16 %v55, %v54
  %v61 = vpack.c.b16 %v57, %v56
  %v82 = vunpack.c.l.b16 %v22
  %v83 = vunpack.c.l.b16 %v23
  %v84 = vunpack.c.l.b16 %v24
  %v85 = vunpack.c.l.b16 %v25
  %v86 = vunpack.c.l.b16 %v26
  %v87 = vunpack.c.l.b16 %v27
  %v88 = vunpack.c.l.b16 %v28
  %v89 = vunpack.c.l.b16 %v29
  %v90 = vunpack.c.l.b16 %v30
  %v91 = vunpack.c.l.b16 %v31
  %v92 = vunpack.c.l.b16 %v32
  %v93 = vunpack.c.l.b16 %v33
  %v94 = vunpack.c.l.b16 %v34
  %v95 = vunpack.c.l.b16 %v35
  %v96 = vunpack.c.l.b16 %v36
  %v97 = vunpack.c.l.b16 %v37
  %v98 = vpack.c.b16 %v83, %v82
  %v99 = vpack.c.b16 %v85, %v84
  %v100 = vpack.c.b16 %v87, %v86
  %v101 = vpack.c.b16 %v89, %v88
  %v102 = vpack.c.b16 %v91, %v90
  %v103 = vpack.c.b16 %v93, %v92
  %v104 = vpack.c.b16 %v95, %v94
  %v105 = vpack.c.b16 %v97, %v96
  %114 = vmatpush.bf16.msra.mxu0 %v105
  %115 = vmatpush.bf16.msra.mxu0 %v104
  %116 = vmatpush.bf16.msra.mxu0 %v103
  %117 = vmatpush.bf16.msra.mxu0 %v102
  %118 = vmatpush.bf16.msra.mxu0 %v101
  %119 = vmatpush.bf16.msra.mxu0 %v100
  %120 = vmatpush.bf16.msra.mxu0 %v99
  %121 = vmatpush.bf16.msra.mxu0 %v98
  %122 = vmatmul.bf16.gmra.mxu0 %v58
  %v123 = vpop.f32.mrf.mxu0
  %v124 = vadd.f32 %v40, %v123
  %v125 = vpop.f32.mrf.mxu0
  %v126 = vadd.f32 %v40, %v125
  %127 = vmatmul.bf16.gmra.mxu0 %v59
  %v128 = vpop.f32.mrf.mxu0
  %v129 = vadd.f32 %v40, %v128
  %v130 = vpop.f32.mrf.mxu0
  %v131 = vadd.f32 %v40, %v130
  %132 = vmatmul.bf16.gmra.mxu0 %v60
  %v133 = vpop.f32.mrf.mxu0
  %v134 = vadd.f32 %v40, %v133
  %v135 = vpop.f32.mrf.mxu0
  %v136 = vadd.f32 %v40, %v135
  %137 = vmatmul.bf16.gmra.mxu0 %v61
  %v138 = vpop.f32.mrf.mxu0
  %v139 = vadd.f32 %v40, %v138
  %v140 = vpop.f32.mrf.mxu0
  %v141 = vadd.f32 %v40, %v140
  %142 = vdwg.mxu0
  %143 = vst [vmem:[%s3] sm:$0xff] %v124
  %144 = vst [vmem:[%s3 + $0x8] sm:$0xff] %v126
  %145 = vst [vmem:[%s3 + $0x10] sm:$0xff] %v129
  %146 = vst [vmem:[%s3 + $0x18] sm:$0xff] %v131
  %147 = vst [vmem:[%s3 + $0x20] sm:$0xff] %v134
  %148 = vst [vmem:[%s3 + $0x28] sm:$0xff] %v136
  %149 = vst [vmem:[%s3 + $0x30] sm:$0xff] %v139
  %150 = vst [vmem:[%s3 + $0x38] sm:$0xff] %v141
  // Predicated region
  $region14: #{decoder_rnn_forward.3} parent=0 // pred_check
    _
  $region15: #{decoder_rnn_forward.3} parent=0 // pred_check_branch
    %152 = sbr.rel (0) target = $region17
  $region16: #{decoder_rnn_forward.3} parent=0 // pred_region
    _
  $region17: #{decoder_rnn_forward.3} parent=0 // pred_fallthru
    _
  // Predicated region
  $region18: #{decoder_rnn_forward.3} parent=0 // pred_check
    _
  $region19: #{decoder_rnn_forward.3} parent=0 // pred_check_branch
    %154 = sbr.rel (0) target = $region21
  $region20: #{decoder_rnn_forward.3} parent=0 // pred_region
    _
  $region21: #{decoder_rnn_forward.3} parent=0 // pred_fallthru
    _

// kernel: decoder_rnn_forward.2
$region0: #{decoder_rnn_forward.2}
  #allocation0 [shape = 'u32[]', space=smem, size = 0x4, offset = 0x4, fixed_abs, tag = 'smem constant byte address 0x4 - core index']
  #allocation1 [shape = 'u32[72,128]{1,0:T(1,128)}', space=vmem, size = 0x9000, scoped, tag = 'internal scratch']
  #allocation2 [shape = 'f32[8,8,512]{2,1,0:T(8,128)}', space=vmem, size = 0x20000, scoped, tag = 'scratch operand']
  %s0 = inlined_call_operand.vmem [shape: bf16[8,8,32], index: 0, kind: input, shape index: {}]
  %s1 = inlined_call_operand.vmem [shape: bf16[32,512], index: 1, kind: input, shape index: {}]
  %s2 = inlined_call_operand.vmem [shape: bf16[128,512], index: 2, kind: input, shape index: {}]
  %s3 = inlined_call_operand.vmem [shape: f32[1,512], index: 3, kind: input, shape index: {}]
  %s4 = inlined_call_operand.vmem [shape: bf16[8,8,128], index: 4, kind: output, shape index: {}]
  %s5 = sld [smem:[#allocation0]]
  $region26: #{decoder_rnn_forward.2} parent=0
    _
  %s7 = ssub.s32 1, %s5
  %s8 = scalar_select 0, %s7, %s5
  // Predicated region
  $region2: #{decoder_rnn_forward.2} parent=0 // pred_check
    _
  $region3: #{decoder_rnn_forward.2} parent=0 // pred_check_branch
    %10 = sbr.rel (0) target = $region5
  $region4: #{decoder_rnn_forward.2} parent=0 // pred_region
    _
  $region5: #{decoder_rnn_forward.2} parent=0 // pred_fallthru
    _
  // Predicated region
  $region6: #{decoder_rnn_forward.2} parent=0 // pred_check
    _
  $region7: #{decoder_rnn_forward.2} parent=0 // pred_check_branch
    %12 = sbr.rel (0) target = $region9
  $region8: #{decoder_rnn_forward.2} parent=0 // pred_region
    _
  $region9: #{decoder_rnn_forward.2} parent=0 // pred_fallthru
    _
  // Predicated region
  $region10: #{decoder_rnn_forward.2} parent=0 // pred_check
    _
  $region11: #{decoder_rnn_forward.2} parent=0 // pred_check_branch
    %14 = sbr.rel (0) target = $region13
  $region12: #{decoder_rnn_forward.2} parent=0 // pred_region
    _
  $region13: #{decoder_rnn_forward.2} parent=0 // pred_fallthru
    _
  // Predicated region
  $region14: #{decoder_rnn_forward.2} parent=0 // pred_check
    _
  $region15: #{decoder_rnn_forward.2} parent=0 // pred_check_branch
    %16 = sbr.rel (0) target = $region17
  $region16: #{decoder_rnn_forward.2} parent=0 // pred_region
    _
  $region17: #{decoder_rnn_forward.2} parent=0 // pred_fallthru
    _
  %v18 = vld [vmem:[%s2] sm:$0xff]
  %v19 = vld [vmem:[%s2 + $0x8] sm:$0xff]
  %v20 = vld [vmem:[%s2 + $0x10] sm:$0xff]
  %v21 = vld [vmem:[%s2 + $0x18] sm:$0xff]
  %v22 = vld [vmem:[%s2 + $0x20] sm:$0xff]
  %v23 = vld [vmem:[%s2 + $0x28] sm:$0xff]
  %v24 = vld [vmem:[%s2 + $0x30] sm:$0xff]
  %v25 = vld [vmem:[%s2 + $0x38] sm:$0xff]
  %v26 = vld [vmem:[%s2 + $0x40] sm:$0xff]
  %v27 = vld [vmem:[%s2 + $0x48] sm:$0xff]
  %v28 = vld [vmem:[%s2 + $0x50] sm:$0xff]
  %v29 = vld [vmem:[%s2 + $0x58] sm:$0xff]
  %v30 = vld [vmem:[%s2 + $0x60] sm:$0xff]
  %v31 = vld [vmem:[%s2 + $0x68] sm:$0xff]
  %v32 = vld [vmem:[%s2 + $0x70] sm:$0xff]
  %v33 = vld [vmem:[%s2 + $0x78] sm:$0xff]
  %v34 = vld [vmem:[%s2 + $0x80] sm:$0xff]
  %v35 = vld [vmem:[%s2 + $0x88] sm:$0xff]
  %v36 = vld [vmem:[%s2 + $0x90] sm:$0xff]
  %v37 = vld [vmem:[%s2 + $0x98] sm:$0xff]
  %v38 = vld [vmem:[%s2 + $0xa0] sm:$0xff]
  %v39 = vld [vmem:[%s2 + $0xa8] sm:$0xff]
  %v40 = vld [vmem:[%s2 + $0xb0] sm:$0xff]
  %v41 = vld [vmem:[%s2 + $0xb8] sm:$0xff]
  %v42 = vld [vmem:[%s2 + $0xc0] sm:$0xff]
  %v43 = vld [vmem:[%s2 + $0xc8] sm:$0xff]
  %v44 = vld [vmem:[%s2 + $0xd0] sm:$0xff]
  %v45 = vld [vmem:[%s2 + $0xd8] sm:$0xff]
  %v46 = vld [vmem:[%s2 + $0xe0] sm:$0xff]
  %v47 = vld [vmem:[%s2 + $0xe8] sm:$0xff]
  %v48 = vld [vmem:[%s2 + $0xf0] sm:$0xff]
  %v49 = vld [vmem:[%s2 + $0xf8] sm:$0xff]
  %v50 = vld [vmem:[%s0] sm:$0xf]
  %v51 = vld [vmem:[%s0 + $0x4] sm:$0xf]
  %v52 = vld [vmem:[%s0 + $0x8] sm:$0xf]
  %v53 = vld [vmem:[%s0 + $0xc] sm:$0xf]
  %v54 = vld [vmem:[%s0 + $0x10] sm:$0xf]
  %v55 = vld [vmem:[%s0 + $0x14] sm:$0xf]
  %v56 = vld [vmem:[%s0 + $0x18] sm:$0xf]
  %v57 = vld [vmem:[%s0 + $0x1c] sm:$0xf]
  %v58 = vld [vmem:[%s1] sm:$0xff]
  %v59 = vld [vmem:[%s1 + $0x8] sm:$0xff]
  %v60 = vld [vmem:[%s1 + $0x10] sm:$0xff]
  %v61 = vld [vmem:[%s1 + $0x18] sm:$0xff]
  %v62 = vld [vmem:[%s1 + $0x20] sm:$0xff]
  %v63 = vld [vmem:[%s1 + $0x28] sm:$0xff]
  %v64 = vld [vmem:[%s1 + $0x30] sm:$0xff]
  %v65 = vld [vmem:[%s1 + $0x38] sm:$0xff]
  %v66 = vld [vmem:[%s3] sm:$0xf]
  %v68 = vperm.slane %v66, 0
  %v69 = vperm.slane %v66, 1
  %v70 = vperm.slane %v66, 2
  %v71 = vperm.slane %v66, 3
  %v84 = vunpack.c.l.b16 %v50
  %v85 = vunpack.c.l.b16 %v51
  %v86 = vunpack.c.l.b16 %v52
  %v87 = vunpack.c.l.b16 %v53
  %v88 = vunpack.c.l.b16 %v54
  %v89 = vunpack.c.l.b16 %v55
  %v90 = vunpack.c.l.b16 %v56
  %v91 = vunpack.c.l.b16 %v57
  %v92 = vpack.c.b16 %v85, %v84
  %v93 = vpack.c.b16 %v87, %v86
  %v94 = vpack.c.b16 %v89, %v88
  %v95 = vpack.c.b16 %v91, %v90
  %v104 = vunpack.c.l.b16 %v58
  %v105 = vunpack.c.h.b16 %v58
  %v106 = vunpack.c.l.b16 %v59
  %v107 = vunpack.c.h.b16 %v59
  %v108 = vunpack.c.l.b16 %v60
  %v109 = vunpack.c.h.b16 %v60
  %v110 = vunpack.c.l.b16 %v61
  %v111 = vunpack.c.h.b16 %v61
  %v112 = vunpack.c.l.b16 %v62
  %v113 = vunpack.c.h.b16 %v62
  %v114 = vunpack.c.l.b16 %v63
  %v115 = vunpack.c.h.b16 %v63
  %v116 = vunpack.c.l.b16 %v64
  %v117 = vunpack.c.h.b16 %v64
  %v118 = vunpack.c.l.b16 %v65
  %v119 = vunpack.c.h.b16 %v65
  %v120 = vpack.c.b16 %v108, %v104
  %v121 = vpack.c.b16 %v109, %v105
  %v122 = vpack.c.b16 %v110, %v106
  %v123 = vpack.c.b16 %v111, %v107
  %v124 = vpack.c.b16 %v116, %v112
  %v125 = vpack.c.b16 %v117, %v113
  %v126 = vpack.c.b16 %v118, %v114
  %v127 = vpack.c.b16 %v119, %v115
  %vm136 = vcmask 261120
  %v138 = vsel %vm136, %v92, 0
  %v141 = vsel %vm136, %v93, 0
  %v144 = vsel %vm136, %v94, 0
  %v147 = vsel %vm136, %v95, 0
  %149 = vmatpush.bf16.msra.mxu0 0
  %150 = vmatpush.bf16.msra.mxu0 0
  %151 = vmatpush.bf16.msra.mxu0 0
  %152 = vmatpush.bf16.msra.mxu0 0
  %153 = vmatpush.bf16.msra.mxu0 0
  %154 = vmatpush.bf16.msra.mxu0 0
  %155 = vmatpush.bf16.msra.mxu0 %v124
  %156 = vmatpush.bf16.msra.mxu0 %v120
  %157 = vmatmul.bf16.gmra.mxu0 %v138
  %v158 = vpop.f32.mrf.mxu0
  %v159 = vadd.f32 %v68, %v158
  %v160 = vpop.f32.mrf.mxu0
  %v161 = vadd.f32 %v68, %v160
  %162 = vmatmul.bf16.gmra.mxu0 %v141
  %v163 = vpop.f32.mrf.mxu0
  %v164 = vadd.f32 %v68, %v163
  %v165 = vpop.f32.mrf.mxu0
  %v166 = vadd.f32 %v68, %v165
  %167 = vmatmul.bf16.gmra.mxu0 %v144
  %v168 = vpop.f32.mrf.mxu0
  %v169 = vadd.f32 %v68, %v168
  %v170 = vpop.f32.mrf.mxu0
  %v171 = vadd.f32 %v68, %v170
  %172 = vmatmul.bf16.gmra.mxu0 %v147
  %v173 = vpop.f32.mrf.mxu0
  %v174 = vadd.f32 %v68, %v173
  %v175 = vpop.f32.mrf.mxu0
  %v176 = vadd.f32 %v68, %v175
  %177 = vdwg.mxu0
  %178 = vmatpush.bf16.msra.mxu0 0
  %179 = vmatpush.bf16.msra.mxu0 0
  %180 = vmatpush.bf16.msra.mxu0 0
  %181 = vmatpush.bf16.msra.mxu0 0
  %182 = vmatpush.bf16.msra.mxu0 0
  %183 = vmatpush.bf16.msra.mxu0 0
  %184 = vmatpush.bf16.msra.mxu0 %v125
  %185 = vmatpush.bf16.msra.mxu0 %v121
  %186 = vmatmul.bf16.gmra.mxu0 %v138
  %v187 = vpop.f32.mrf.mxu0
  %v188 = vadd.f32 %v69, %v187
  %v189 = vpop.f32.mrf.mxu0
  %v190 = vadd.f32 %v69, %v189
  %191 = vmatmul.bf16.gmra.mxu0 %v141
  %v192 = vpop.f32.mrf.mxu0
  %v193 = vadd.f32 %v69, %v192
  %v194 = vpop.f32.mrf.mxu0
  %v195 = vadd.f32 %v69, %v194
  %196 = vmatmul.bf16.gmra.mxu0 %v144
  %v197 = vpop.f32.mrf.mxu0
  %v198 = vadd.f32 %v69, %v197
  %v199 = vpop.f32.mrf.mxu0
  %v200 = vadd.f32 %v69, %v199
  %201 = vmatmul.bf16.gmra.mxu0 %v147
  %v202 = vpop.f32.mrf.mxu0
  %v203 = vadd.f32 %v69, %v202
  %v204 = vpop.f32.mrf.mxu0
  %v205 = vadd.f32 %v69, %v204
  %206 = vdwg.mxu0
  %207 = vmatpush.bf16.msra.mxu0 0
  %208 = vmatpush.bf16.msra.mxu0 0
  %209 = vmatpush.bf16.msra.mxu0 0
  %210 = vmatpush.bf16.msra.mxu0 0
  %211 = vmatpush.bf16.msra.mxu0 0
  %212 = vmatpush.bf16.msra.mxu0 0
  %213 = vmatpush.bf16.msra.mxu0 %v126
  %214 = vmatpush.bf16.msra.mxu0 %v122
  %215 = vmatmul.bf16.gmra.mxu0 %v138
  %v216 = vpop.f32.mrf.mxu0
  %v217 = vadd.f32 %v70, %v216
  %v218 = vpop.f32.mrf.mxu0
  %v219 = vadd.f32 %v70, %v218
  %220 = vmatmul.bf16.gmra.mxu0 %v141
  %v221 = vpop.f32.mrf.mxu0
  %v222 = vadd.f32 %v70, %v221
  %v223 = vpop.f32.mrf.mxu0
  %v224 = vadd.f32 %v70, %v223
  %225 = vmatmul.bf16.gmra.mxu0 %v144
  %v226 = vpop.f32.mrf.mxu0
  %v227 = vadd.f32 %v70, %v226
  %v228 = vpop.f32.mrf.mxu0
  %v229 = vadd.f32 %v70, %v228
  %230 = vmatmul.bf16.gmra.mxu0 %v147
  %v231 = vpop.f32.mrf.mxu0
  %v232 = vadd.f32 %v70, %v231
  %v233 = vpop.f32.mrf.mxu0
  %v234 = vadd.f32 %v70, %v233
  %235 = vdwg.mxu0
  %236 = vmatpush.bf16.msra.mxu0 0
  %237 = vmatpush.bf16.msra.mxu0 0
  %238 = vmatpush.bf16.msra.mxu0 0
  %239 = vmatpush.bf16.msra.mxu0 0
  %240 = vmatpush.bf16.msra.mxu0 0
  %241 = vmatpush.bf16.msra.mxu0 0
  %242 = vmatpush.bf16.msra.mxu0 %v127
  %243 = vmatpush.bf16.msra.mxu0 %v123
  %244 = vmatmul.bf16.gmra.mxu0 %v138
  %v245 = vpop.f32.mrf.mxu0
  %v246 = vadd.f32 %v71, %v245
  %v247 = vpop.f32.mrf.mxu0
  %v248 = vadd.f32 %v71, %v247
  %249 = vmatmul.bf16.gmra.mxu0 %v141
  %v250 = vpop.f32.mrf.mxu0
  %v251 = vadd.f32 %v71, %v250
  %v252 = vpop.f32.mrf.mxu0
  %v253 = vadd.f32 %v71, %v252
  %254 = vmatmul.bf16.gmra.mxu0 %v144
  %v255 = vpop.f32.mrf.mxu0
  %v256 = vadd.f32 %v71, %v255
  %v257 = vpop.f32.mrf.mxu0
  %v258 = vadd.f32 %v71, %v257
  %259 = vmatmul.bf16.gmra.mxu0 %v147
  %v260 = vpop.f32.mrf.mxu0
  %v261 = vadd.f32 %v71, %v260
  %v262 = vpop.f32.mrf.mxu0
  %v263 = vadd.f32 %v71, %v262
  %264 = vdwg.mxu0
  %265 = vst [vmem:[#allocation2] sm:$0xff] %v159
  %266 = vst [vmem:[#allocation2 + $0x8] sm:$0xff] %v188
  %267 = vst [vmem:[#allocation2 + $0x10] sm:$0xff] %v217
  %268 = vst [vmem:[#allocation2 + $0x18] sm:$0xff] %v246
  %269 = vst [vmem:[#allocation2 + $0x20] sm:$0xff] %v161
  %270 = vst [vmem:[#allocation2 + $0x28] sm:$0xff] %v190
  %271 = vst [vmem:[#allocation2 + $0x30] sm:$0xff] %v219
  %272 = vst [vmem:[#allocation2 + $0x38] sm:$0xff] %v248
  %273 = vst [vmem:[#allocation2 + $0x40] sm:$0xff] %v164
  %274 = vst [vmem:[#allocation2 + $0x48] sm:$0xff] %v193
  %275 = vst [vmem:[#allocation2 + $0x50] sm:$0xff] %v222
  %276 = vst [vmem:[#allocation2 + $0x58] sm:$0xff] %v251
  %277 = vst [vmem:[#allocation2 + $0x60] sm:$0xff] %v166
  %278 = vst [vmem:[#allocation2 + $0x68] sm:$0xff] %v195
  %279 = vst [vmem:[#allocation2 + $0x70] sm:$0xff] %v224
  %280 = vst [vmem:[#allocation2 + $0x78] sm:$0xff] %v253
  %281 = vst [vmem:[#allocation2 + $0x80] sm:$0xff] %v169
  %282 = vst [vmem:[#allocation2 + $0x88] sm:$0xff] %v198
  %283 = vst [vmem:[#allocation2 + $0x90] sm:$0xff] %v227
  %284 = vst [vmem:[#allocation2 + $0x98] sm:$0xff] %v256
  %285 = vst [vmem:[#allocation2 + $0xa0] sm:$0xff] %v171
  %286 = vst [vmem:[#allocation2 + $0xa8] sm:$0xff] %v200
  %287 = vst [vmem:[#allocation2 + $0xb0] sm:$0xff] %v229
  %288 = vst [vmem:[#allocation2 + $0xb8] sm:$0xff] %v258
  %289 = vst [vmem:[#allocation2 + $0xc0] sm:$0xff] %v174
  %290 = vst [vmem:[#allocation2 + $0xc8] sm:$0xff] %v203
  %291 = vst [vmem:[#allocation2 + $0xd0] sm:$0xff] %v232
  %292 = vst [vmem:[#allocation2 + $0xd8] sm:$0xff] %v261
  %293 = vst [vmem:[#allocation2 + $0xe0] sm:$0xff] %v176
  %294 = vst [vmem:[#allocation2 + $0xe8] sm:$0xff] %v205
  %295 = vst [vmem:[#allocation2 + $0xf0] sm:$0xff] %v234
  %296 = vst [vmem:[#allocation2 + $0xf8] sm:$0xff] %v263
  %v297 = vld [vmem:[#allocation2] sm:$0xff]
  %v298 = vld [vmem:[#allocation2 + $0x8] sm:$0xff]
  %v299 = vld [vmem:[#allocation2 + $0x10] sm:$0xff]
  %v300 = vld [vmem:[#allocation2 + $0x18] sm:$0xff]
  %v301 = vxor.u32 %v297, 2147483648
  %v302 = vmul.f32 %v301, 1.442695
  %v303 = vpow.pop %v302
  %v304 = vadd.f32 %v303, 1.0
  %v305 = vrcp.pop %v304
  %v306 = vmul.f32 %v304, %v305
  %v307 = vsub.f32 1.0, %v306
  %v308 = vmul.f32 %v305, %v307
  %v309 = vadd.f32 %v305, %v308
  %vm310 = vweird.f32 %v304
  %vm311 = vweird.f32 %v305
  %vm312 = vmor %vm310, %vm311
  %v313 = vsel %vm312, %v305, %v309
  %v314 = vand.u32 2147483647, %v304
  %vm315 = vcmp.eq.f32.partialorder %v314, 8.507059e+37
  %v316 = vand.u32 %v304, 2147483648
  %v317 = vor.u32 1.1754944e-38, %v316
  %v318 = vsel %vm315, %v317, %v313
  %v319 = vmul.f32 1.0, %v318
  %v320 = vxor.u32 %v298, 2147483648
  %v321 = vmul.f32 %v320, 1.442695
  %v322 = vpow.pop %v321
  %v323 = vadd.f32 %v322, 1.0
  %v324 = vrcp.pop %v323
  %v325 = vmul.f32 %v323, %v324
  %v326 = vsub.f32 1.0, %v325
  %v327 = vmul.f32 %v324, %v326
  %v328 = vadd.f32 %v324, %v327
  %vm329 = vweird.f32 %v323
  %vm330 = vweird.f32 %v324
  %vm331 = vmor %vm329, %vm330
  %v332 = vsel %vm331, %v324, %v328
  %v333 = vand.u32 2147483647, %v323
  %vm334 = vcmp.eq.f32.partialorder %v333, 8.507059e+37
  %v335 = vand.u32 %v323, 2147483648
  %v336 = vor.u32 1.1754944e-38, %v335
  %v337 = vsel %vm334, %v336, %v332
  %v338 = vmul.f32 1.0, %v337
  %v339 = vtanh.pop %v299
  %v340 = vxor.u32 %v300, 2147483648
  %v341 = vmul.f32 %v340, 1.442695
  %v342 = vpow.pop %v341
  %v343 = vadd.f32 %v342, 1.0
  %v344 = vrcp.pop %v343
  %v345 = vmul.f32 %v343, %v344
  %v346 = vsub.f32 1.0, %v345
  %v347 = vmul.f32 %v344, %v346
  %v348 = vadd.f32 %v344, %v347
  %vm349 = vweird.f32 %v343
  %vm350 = vweird.f32 %v344
  %vm351 = vmor %vm349, %vm350
  %v352 = vsel %vm351, %v344, %v348
  %v353 = vand.u32 2147483647, %v343
  %vm354 = vcmp.eq.f32.partialorder %v353, 8.507059e+37
  %v355 = vand.u32 %v343, 2147483648
  %v356 = vor.u32 1.1754944e-38, %v355
  %v357 = vsel %vm354, %v356, %v352
  %v358 = vmul.f32 1.0, %v357
  %v359 = vmul.f32 %v338, 0.0
  %v360 = vmul.f32 %v319, %v339
  %v361 = vadd.f32 %v359, %v360
  %v362 = vtanh.pop %v361
  %v363 = vmul.f32 %v358, %v362
  %v364 = vpack.c.bf16 %v363, %v363
  %365 = vst [vmem:[%s4] sm:$0xf] %v364
  %s366 = scalar_lea.vmem [#allocation2], 32
  %v367 = vld [vmem:[%s366] sm:$0xff]
  %v368 = vld [vmem:[%s366 + $0x8] sm:$0xff]
  %v369 = vld [vmem:[%s366 + $0x10] sm:$0xff]
  %v370 = vld [vmem:[%s366 + $0x18] sm:$0xff]
  %v403 = vunpack.c.l.b16 %v18
  %v404 = vunpack.c.h.b16 %v18
  %v405 = vunpack.c.l.b16 %v19
  %v406 = vunpack.c.h.b16 %v19
  %v407 = vunpack.c.l.b16 %v20
  %v408 = vunpack.c.h.b16 %v20
  %v409 = vunpack.c.l.b16 %v21
  %v410 = vunpack.c.h.b16 %v21
  %v411 = vunpack.c.l.b16 %v22
  %v412 = vunpack.c.h.b16 %v22
  %v413 = vunpack.c.l.b16 %v23
  %v414 = vunpack.c.h.b16 %v23
  %v415 = vunpack.c.l.b16 %v24
  %v416 = vunpack.c.h.b16 %v24
  %v417 = vunpack.c.l.b16 %v25
  %v418 = vunpack.c.h.b16 %v25
  %v419 = vunpack.c.l.b16 %v26
  %v420 = vunpack.c.h.b16 %v26
  %v421 = vunpack.c.l.b16 %v27
  %v422 = vunpack.c.h.b16 %v27
  %v423 = vunpack.c.l.b16 %v28
  %v424 = vunpack.c.h.b16 %v28
  %v425 = vunpack.c.l.b16 %v29
  %v426 = vunpack.c.h.b16 %v29
  %v427 = vunpack.c.l.b16 %v30
  %v428 = vunpack.c.h.b16 %v30
  %v429 = vunpack.c.l.b16 %v31
  %v430 = vunpack.c.h.b16 %v31
  %v431 = vunpack.c.l.b16 %v32
  %v432 = vunpack.c.h.b16 %v32
  %v433 = vunpack.c.l.b16 %v33
  %v434 = vunpack.c.h.b16 %v33
  %v435 = vunpack.c.l.b16 %v34
  %v436 = vunpack.c.h.b16 %v34
  %v437 = vunpack.c.l.b16 %v35
  %v438 = vunpack.c.h.b16 %v35
  %v439 = vunpack.c.l.b16 %v36
  %v440 = vunpack.c.h.b16 %v36
  %v441 = vunpack.c.l.b16 %v37
  %v442 = vunpack.c.h.b16 %v37
  %v443 = vunpack.c.l.b16 %v38
  %v444 = vunpack.c.h.b16 %v38
  %v445 = vunpack.c.l.b16 %v39
  %v446 = vunpack.c.h.b16 %v39
  %v447 = vunpack.c.l.b16 %v40
  %v448 = vunpack.c.h.b16 %v40
  %v449 = vunpack.c.l.b16 %v41
  %v450 = vunpack.c.h.b16 %v41
  %v451 = vunpack.c.l.b16 %v42
  %v452 = vunpack.c.h.b16 %v42
  %v453 = vunpack.c.l.b16 %v43
  %v454 = vunpack.c.h.b16 %v43
  %v455 = vunpack.c.l.b16 %v44
  %v456 = vunpack.c.h.b16 %v44
  %v457 = vunpack.c.l.b16 %v45
  %v458 = vunpack.c.h.b16 %v45
  %v459 = vunpack.c.l.b16 %v46
  %v460 = vunpack.c.h.b16 %v46
  %v461 = vunpack.c.l.b16 %v47
  %v462 = vunpack.c.h.b16 %v47
  %v463 = vunpack.c.l.b16 %v48
  %v464 = vunpack.c.h.b16 %v48
  %v465 = vunpack.c.l.b16 %v49
  %v466 = vunpack.c.h.b16 %v49
  %v467 = vpack.c.b16 %v407, %v403
  %v468 = vpack.c.b16 %v408, %v404
  %v469 = vpack.c.b16 %v409, %v405
  %v470 = vpack.c.b16 %v410, %v406
  %v471 = vpack.c.b16 %v415, %v411
  %v472 = vpack.c.b16 %v416, %v412
  %v473 = vpack.c.b16 %v417, %v413
  %v474 = vpack.c.b16 %v418, %v414
  %v475 = vpack.c.b16 %v423, %v419
  %v476 = vpack.c.b16 %v424, %v420
  %v477 = vpack.c.b16 %v425, %v421
  %v478 = vpack.c.b16 %v426, %v422
  %v479 = vpack.c.b16 %v431, %v427
  %v480 = vpack.c.b16 %v432, %v428
  %v481 = vpack.c.b16 %v433, %v429
  %v482 = vpack.c.b16 %v434, %v430
  %v483 = vpack.c.b16 %v439, %v435
  %v484 = vpack.c.b16 %v440, %v436
  %v485 = vpack.c.b16 %v441, %v437
  %v486 = vpack.c.b16 %v442, %v438
  %v487 = vpack.c.b16 %v447, %v443
  %v488 = vpack.c.b16 %v448, %v444
  %v489 = vpack.c.b16 %v449, %v445
  %v490 = vpack.c.b16 %v450, %v446
  %v491 = vpack.c.b16 %v455, %v451
  %v492 = vpack.c.b16 %v456, %v452
  %v493 = vpack.c.b16 %v457, %v453
  %v494 = vpack.c.b16 %v458, %v454
  %v495 = vpack.c.b16 %v463, %v459
  %v496 = vpack.c.b16 %v464, %v460
  %v497 = vpack.c.b16 %v465, %v461
  %v498 = vpack.c.b16 %v466, %v462
  %531 = vmatpush.bf16.msra.mxu0 %v495
  %532 = vmatpush.bf16.msra.mxu0 %v491
  %533 = vmatpush.bf16.msra.mxu0 %v487
  %534 = vmatpush.bf16.msra.mxu0 %v483
  %535 = vmatpush.bf16.msra.mxu0 %v479
  %536 = vmatpush.bf16.msra.mxu0 %v475
  %537 = vmatpush.bf16.msra.mxu0 %v471
  %538 = vmatpush.bf16.msra.mxu0 %v467
  %539 = vmatmul.bf16.gmra.mxu0 %v364
  %v540 = vpop.f32.mrf.mxu0
  %v541 = vadd.f32 0.0, %v540
  %v542 = vpop.f32.mrf.mxu0
  %543 = vdwg.mxu0
  %544 = vmatpush.bf16.msra.mxu0 %v496
  %545 = vmatpush.bf16.msra.mxu0 %v492
  %546 = vmatpush.bf16.msra.mxu0 %v488
  %547 = vmatpush.bf16.msra.mxu0 %v484
  %548 = vmatpush.bf16.msra.mxu0 %v480
  %549 = vmatpush.bf16.msra.mxu0 %v476
  %550 = vmatpush.bf16.msra.mxu0 %v472
  %551 = vmatpush.bf16.msra.mxu0 %v468
  %552 = vmatmul.bf16.gmra.mxu0 %v364
  %v553 = vpop.f32.mrf.mxu0
  %v554 = vadd.f32 0.0, %v553
  %v555 = vpop.f32.mrf.mxu0
  %556 = vdwg.mxu0
  %557 = vmatpush.bf16.msra.mxu0 %v497
  %558 = vmatpush.bf16.msra.mxu0 %v493
  %559 = vmatpush.bf16.msra.mxu0 %v489
  %560 = vmatpush.bf16.msra.mxu0 %v485
  %561 = vmatpush.bf16.msra.mxu0 %v481
  %562 = vmatpush.bf16.msra.mxu0 %v477
  %563 = vmatpush.bf16.msra.mxu0 %v473
  %564 = vmatpush.bf16.msra.mxu0 %v469
  %565 = vmatmul.bf16.gmra.mxu0 %v364
  %v566 = vpop.f32.mrf.mxu0
  %v567 = vadd.f32 0.0, %v566
  %v568 = vpop.f32.mrf.mxu0
  %569 = vdwg.mxu0
  %570 = vmatpush.bf16.msra.mxu0 %v498
  %571 = vmatpush.bf16.msra.mxu0 %v494
  %572 = vmatpush.bf16.msra.mxu0 %v490
  %573 = vmatpush.bf16.msra.mxu0 %v486
  %574 = vmatpush.bf16.msra.mxu0 %v482
  %575 = vmatpush.bf16.msra.mxu0 %v478
  %576 = vmatpush.bf16.msra.mxu0 %v474
  %577 = vmatpush.bf16.msra.mxu0 %v470
  %578 = vmatmul.bf16.gmra.mxu0 %v364
  %v579 = vpop.f32.mrf.mxu0
  %v580 = vadd.f32 0.0, %v579
  %v581 = vpop.f32.mrf.mxu0
  %582 = vdwg.mxu0
  %v583 = vadd.f32 %v367, %v541
  %v584 = vadd.f32 %v368, %v554
  %v585 = vadd.f32 %v369, %v567
  %v586 = vadd.f32 %v370, %v580
  %v587 = vxor.u32 %v583, 2147483648
  %v588 = vmul.f32 %v587, 1.442695
  %v589 = vpow.pop %v588
  %v590 = vadd.f32 %v589, 1.0
  %v591 = vrcp.pop %v590
  %v592 = vmul.f32 %v590, %v591
  %v593 = vsub.f32 1.0, %v592
  %v594 = vmul.f32 %v591, %v593
  %v595 = vadd.f32 %v591, %v594
  %vm596 = vweird.f32 %v590
  %vm597 = vweird.f32 %v591
  %vm598 = vmor %vm596, %vm597
  %v599 = vsel %vm598, %v591, %v595
  %v600 = vand.u32 2147483647, %v590
  %vm601 = vcmp.eq.f32.partialorder %v600, 8.507059e+37
  %v602 = vand.u32 %v590, 2147483648
  %v603 = vor.u32 1.1754944e-38, %v602
  %v604 = vsel %vm601, %v603, %v599
  %v605 = vmul.f32 1.0, %v604
  %v606 = vxor.u32 %v584, 2147483648
  %v607 = vmul.f32 %v606, 1.442695
  %v608 = vpow.pop %v607
  %v609 = vadd.f32 %v608, 1.0
  %v610 = vrcp.pop %v609
  %v611 = vmul.f32 %v609, %v610
  %v612 = vsub.f32 1.0, %v611
  %v613 = vmul.f32 %v610, %v612
  %v614 = vadd.f32 %v610, %v613
  %vm615 = vweird.f32 %v609
  %vm616 = vweird.f32 %v610
  %vm617 = vmor %vm615, %vm616
  %v618 = vsel %vm617, %v610, %v614
  %v619 = vand.u32 2147483647, %v609
  %vm620 = vcmp.eq.f32.partialorder %v619, 8.507059e+37
  %v621 = vand.u32 %v609, 2147483648
  %v622 = vor.u32 1.1754944e-38, %v621
  %v623 = vsel %vm620, %v622, %v618
  %v624 = vmul.f32 1.0, %v623
  %v625 = vtanh.pop %v585
  %v626 = vxor.u32 %v586, 2147483648
  %v627 = vmul.f32 %v626, 1.442695
  %v628 = vpow.pop %v627
  %v629 = vadd.f32 %v628, 1.0
  %v630 = vrcp.pop %v629
  %v631 = vmul.f32 %v629, %v630
  %v632 = vsub.f32 1.0, %v631
  %v633 = vmul.f32 %v630, %v632
  %v634 = vadd.f32 %v630, %v633
  %vm635 = vweird.f32 %v629
  %vm636 = vweird.f32 %v630
  %vm637 = vmor %vm635, %vm636
  %v638 = vsel %vm637, %v630, %v634
  %v639 = vand.u32 2147483647, %v629
  %vm640 = vcmp.eq.f32.partialorder %v639, 8.507059e+37
  %v641 = vand.u32 %v629, 2147483648
  %v642 = vor.u32 1.1754944e-38, %v641
  %v643 = vsel %vm640, %v642, %v638
  %v644 = vmul.f32 1.0, %v643
  %v645 = vmul.f32 %v624, %v361
  %v646 = vmul.f32 %v605, %v625
  %v647 = vadd.f32 %v645, %v646
  %v648 = vtanh.pop %v647
  %v649 = vmul.f32 %v644, %v648
  %v650 = vpack.c.bf16 %v649, %v649
  %s651 = scalar_lea.vmem %s4, 4
  %652 = vst [vmem:[%s651] sm:$0xf] %v650
  %s653 = scalar_lea.vmem [#allocation2], 64
  %v654 = vld [vmem:[%s653] sm:$0xff]
  %v655 = vld [vmem:[%s653 + $0x8] sm:$0xff]
  %v656 = vld [vmem:[%s653 + $0x10] sm:$0xff]
  %v657 = vld [vmem:[%s653 + $0x18] sm:$0xff]
  %658 = vmatpush.bf16.msra.mxu0 %v495
  %659 = vmatpush.bf16.msra.mxu0 %v491
  %660 = vmatpush.bf16.msra.mxu0 %v487
  %661 = vmatpush.bf16.msra.mxu0 %v483
  %662 = vmatpush.bf16.msra.mxu0 %v479
  %663 = vmatpush.bf16.msra.mxu0 %v475
  %664 = vmatpush.bf16.msra.mxu0 %v471
  %665 = vmatpush.bf16.msra.mxu0 %v467
  %666 = vmatmul.bf16.gmra.mxu0 %v650
  %v667 = vpop.f32.mrf.mxu0
  %v668 = vadd.f32 0.0, %v667
  %v669 = vpop.f32.mrf.mxu0
  %670 = vdwg.mxu0
  %671 = vmatpush.bf16.msra.mxu0 %v496
  %672 = vmatpush.bf16.msra.mxu0 %v492
  %673 = vmatpush.bf16.msra.mxu0 %v488
  %674 = vmatpush.bf16.msra.mxu0 %v484
  %675 = vmatpush.bf16.msra.mxu0 %v480
  %676 = vmatpush.bf16.msra.mxu0 %v476
  %677 = vmatpush.bf16.msra.mxu0 %v472
  %678 = vmatpush.bf16.msra.mxu0 %v468
  %679 = vmatmul.bf16.gmra.mxu0 %v650
  %v680 = vpop.f32.mrf.mxu0
  %v681 = vadd.f32 0.0, %v680
  %v682 = vpop.f32.mrf.mxu0
  %683 = vdwg.mxu0
  %684 = vmatpush.bf16.msra.mxu0 %v497
  %685 = vmatpush.bf16.msra.mxu0 %v493
  %686 = vmatpush.bf16.msra.mxu0 %v489
  %687 = vmatpush.bf16.msra.mxu0 %v485
  %688 = vmatpush.bf16.msra.mxu0 %v481
  %689 = vmatpush.bf16.msra.mxu0 %v477
  %690 = vmatpush.bf16.msra.mxu0 %v473
  %691 = vmatpush.bf16.msra.mxu0 %v469
  %692 = vmatmul.bf16.gmra.mxu0 %v650
  %v693 = vpop.f32.mrf.mxu0
  %v694 = vadd.f32 0.0, %v693
  %v695 = vpop.f32.mrf.mxu0
  %696 = vdwg.mxu0
  %697 = vmatpush.bf16.msra.mxu0 %v498
  %698 = vmatpush.bf16.msra.mxu0 %v494
  %699 = vmatpush.bf16.msra.mxu0 %v490
  %700 = vmatpush.bf16.msra.mxu0 %v486
  %701 = vmatpush.bf16.msra.mxu0 %v482
  %702 = vmatpush.bf16.msra.mxu0 %v478
  %703 = vmatpush.bf16.msra.mxu0 %v474
  %704 = vmatpush.bf16.msra.mxu0 %v470
  %705 = vmatmul.bf16.gmra.mxu0 %v650
  %v706 = vpop.f32.mrf.mxu0
  %v707 = vadd.f32 0.0, %v706
  %v708 = vpop.f32.mrf.mxu0
  %709 = vdwg.mxu0
  %v710 = vadd.f32 %v654, %v668
  %v711 = vadd.f32 %v655, %v681
  %v712 = vadd.f32 %v656, %v694
  %v713 = vadd.f32 %v657, %v707
  %v714 = vxor.u32 %v710, 2147483648
  %v715 = vmul.f32 %v714, 1.442695
  %v716 = vpow.pop %v715
  %v717 = vadd.f32 %v716, 1.0
  %v718 = vrcp.pop %v717
  %v719 = vmul.f32 %v717, %v718
  %v720 = vsub.f32 1.0, %v719
  %v721 = vmul.f32 %v718, %v720
  %v722 = vadd.f32 %v718, %v721
  %vm723 = vweird.f32 %v717
  %vm724 = vweird.f32 %v718
  %vm725 = vmor %vm723, %vm724
  %v726 = vsel %vm725, %v718, %v722
  %v727 = vand.u32 2147483647, %v717
  %vm728 = vcmp.eq.f32.partialorder %v727, 8.507059e+37
  %v729 = vand.u32 %v717, 2147483648
  %v730 = vor.u32 1.1754944e-38, %v729
  %v731 = vsel %vm728, %v730, %v726
  %v732 = vmul.f32 1.0, %v731
  %v733 = vxor.u32 %v711, 2147483648
  %v734 = vmul.f32 %v733, 1.442695
  %v735 = vpow.pop %v734
  %v736 = vadd.f32 %v735, 1.0
  %v737 = vrcp.pop %v736
  %v738 = vmul.f32 %v736, %v737
  %v739 = vsub.f32 1.0, %v738
  %v740 = vmul.f32 %v737, %v739
  %v741 = vadd.f32 %v737, %v740
  %vm742 = vweird.f32 %v736
  %vm743 = vweird.f32 %v737
  %vm744 = vmor %vm742, %vm743
  %v745 = vsel %vm744, %v737, %v741
  %v746 = vand.u32 2147483647, %v736
  %vm747 = vcmp.eq.f32.partialorder %v746, 8.507059e+37
  %v748 = vand.u32 %v736, 2147483648
  %v749 = vor.u32 1.1754944e-38, %v748
  %v750 = vsel %vm747, %v749, %v745
  %v751 = vmul.f32 1.0, %v750
  %v752 = vtanh.pop %v712
  %v753 = vxor.u32 %v713, 2147483648
  %v754 = vmul.f32 %v753, 1.442695
  %v755 = vpow.pop %v754
  %v756 = vadd.f32 %v755, 1.0
  %v757 = vrcp.pop %v756
  %v758 = vmul.f32 %v756, %v757
  %v759 = vsub.f32 1.0, %v758
  %v760 = vmul.f32 %v757, %v759
  %v761 = vadd.f32 %v757, %v760
  %vm762 = vweird.f32 %v756
  %vm763 = vweird.f32 %v757
  %vm764 = vmor %vm762, %vm763
  %v765 = vsel %vm764, %v757, %v761
  %v766 = vand.u32 2147483647, %v756
  %vm767 = vcmp.eq.f32.partialorder %v766, 8.507059e+37
  %v768 = vand.u32 %v756, 2147483648
  %v769 = vor.u32 1.1754944e-38, %v768
  %v770 = vsel %vm767, %v769, %v765
  %v771 = vmul.f32 1.0, %v770
  %v772 = vmul.f32 %v751, %v647
  %v773 = vmul.f32 %v732, %v752
  %v774 = vadd.f32 %v772, %v773
  %v775 = vtanh.pop %v774
  %v776 = vmul.f32 %v771, %v775
  %v777 = vpack.c.bf16 %v776, %v776
  %s778 = scalar_lea.vmem %s4, 8
  %779 = vst [vmem:[%s778] sm:$0xf] %v777
  %s780 = scalar_lea.vmem [#allocation2], 96
  %v781 = vld [vmem:[%s780] sm:$0xff]
  %v782 = vld [vmem:[%s780 + $0x8] sm:$0xff]
  %v783 = vld [vmem:[%s780 + $0x10] sm:$0xff]
  %v784 = vld [vmem:[%s780 + $0x18] sm:$0xff]
  %785 = vmatpush.bf16.msra.mxu0 %v495
  %786 = vmatpush.bf16.msra.mxu0 %v491
  %787 = vmatpush.bf16.msra.mxu0 %v487
  %788 = vmatpush.bf16.msra.mxu0 %v483
  %789 = vmatpush.bf16.msra.mxu0 %v479
  %790 = vmatpush.bf16.msra.mxu0 %v475
  %791 = vmatpush.bf16.msra.mxu0 %v471
  %792 = vmatpush.bf16.msra.mxu0 %v467
  %793 = vmatmul.bf16.gmra.mxu0 %v777
  %v794 = vpop.f32.mrf.mxu0
  %v795 = vadd.f32 0.0, %v794
  %v796 = vpop.f32.mrf.mxu0
  %797 = vdwg.mxu0
  %798 = vmatpush.bf16.msra.mxu0 %v496
  %799 = vmatpush.bf16.msra.mxu0 %v492
  %800 = vmatpush.bf16.msra.mxu0 %v488
  %801 = vmatpush.bf16.msra.mxu0 %v484
  %802 = vmatpush.bf16.msra.mxu0 %v480
  %803 = vmatpush.bf16.msra.mxu0 %v476
  %804 = vmatpush.bf16.msra.mxu0 %v472
  %805 = vmatpush.bf16.msra.mxu0 %v468
  %806 = vmatmul.bf16.gmra.mxu0 %v777
  %v807 = vpop.f32.mrf.mxu0
  %v808 = vadd.f32 0.0, %v807
  %v809 = vpop.f32.mrf.mxu0
  %810 = vdwg.mxu0
  %811 = vmatpush.bf16.msra.mxu0 %v497
  %812 = vmatpush.bf16.msra.mxu0 %v493
  %813 = vmatpush.bf16.msra.mxu0 %v489
  %814 = vmatpush.bf16.msra.mxu0 %v485
  %815 = vmatpush.bf16.msra.mxu0 %v481
  %816 = vmatpush.bf16.msra.mxu0 %v477
  %817 = vmatpush.bf16.msra.mxu0 %v473
  %818 = vmatpush.bf16.msra.mxu0 %v469
  %819 = vmatmul.bf16.gmra.mxu0 %v777
  %v820 = vpop.f32.mrf.mxu0
  %v821 = vadd.f32 0.0, %v820
  %v822 = vpop.f32.mrf.mxu0
  %823 = vdwg.mxu0
  %824 = vmatpush.bf16.msra.mxu0 %v498
  %825 = vmatpush.bf16.msra.mxu0 %v494
  %826 = vmatpush.bf16.msra.mxu0 %v490
  %827 = vmatpush.bf16.msra.mxu0 %v486
  %828 = vmatpush.bf16.msra.mxu0 %v482
  %829 = vmatpush.bf16.msra.mxu0 %v478
  %830 = vmatpush.bf16.msra.mxu0 %v474
  %831 = vmatpush.bf16.msra.mxu0 %v470
  %832 = vmatmul.bf16.gmra.mxu0 %v777
  %v833 = vpop.f32.mrf.mxu0
  %v834 = vadd.f32 0.0, %v833
  %v835 = vpop.f32.mrf.mxu0
  %836 = vdwg.mxu0
  %v837 = vadd.f32 %v781, %v795
  %v838 = vadd.f32 %v782, %v808
  %v839 = vadd.f32 %v783, %v821
  %v840 = vadd.f32 %v784, %v834
  %v841 = vxor.u32 %v837, 2147483648
  %v842 = vmul.f32 %v841, 1.442695
  %v843 = vpow.pop %v842
  %v844 = vadd.f32 %v843, 1.0
  %v845 = vrcp.pop %v844
  %v846 = vmul.f32 %v844, %v845
  %v847 = vsub.f32 1.0, %v846
  %v848 = vmul.f32 %v845, %v847
  %v849 = vadd.f32 %v845, %v848
  %vm850 = vweird.f32 %v844
  %vm851 = vweird.f32 %v845
  %vm852 = vmor %vm850, %vm851
  %v853 = vsel %vm852, %v845, %v849
  %v854 = vand.u32 2147483647, %v844
  %vm855 = vcmp.eq.f32.partialorder %v854, 8.507059e+37
  %v856 = vand.u32 %v844, 2147483648
  %v857 = vor.u32 1.1754944e-38, %v856
  %v858 = vsel %vm855, %v857, %v853
  %v859 = vmul.f32 1.0, %v858
  %v860 = vxor.u32 %v838, 2147483648
  %v861 = vmul.f32 %v860, 1.442695
  %v862 = vpow.pop %v861
  %v863 = vadd.f32 %v862, 1.0
  %v864 = vrcp.pop %v863
  %v865 = vmul.f32 %v863, %v864
  %v866 = vsub.f32 1.0, %v865
  %v867 = vmul.f32 %v864, %v866
  %v868 = vadd.f32 %v864, %v867
  %vm869 = vweird.f32 %v863
  %vm870 = vweird.f32 %v864
  %vm871 = vmor %vm869, %vm870
  %v872 = vsel %vm871, %v864, %v868
  %v873 = vand.u32 2147483647, %v863
  %vm874 = vcmp.eq.f32.partialorder %v873, 8.507059e+37
  %v875 = vand.u32 %v863, 2147483648
  %v876 = vor.u32 1.1754944e-38, %v875
  %v877 = vsel %vm874, %v876, %v872
  %v878 = vmul.f32 1.0, %v877
  %v879 = vtanh.pop %v839
  %v880 = vxor.u32 %v840, 2147483648
  %v881 = vmul.f32 %v880, 1.442695
  %v882 = vpow.pop %v881
  %v883 = vadd.f32 %v882, 1.0
  %v884 = vrcp.pop %v883
  %v885 = vmul.f32 %v883, %v884
  %v886 = vsub.f32 1.0, %v885
  %v887 = vmul.f32 %v884, %v886
  %v888 = vadd.f32 %v884, %v887
  %vm889 = vweird.f32 %v883
  %vm890 = vweird.f32 %v884
  %vm891 = vmor %vm889, %vm890
  %v892 = vsel %vm891, %v884, %v888
  %v893 = vand.u32 2147483647, %v883
  %vm894 = vcmp.eq.f32.partialorder %v893, 8.507059e+37
  %v895 = vand.u32 %v883, 2147483648
  %v896 = vor.u32 1.1754944e-38, %v895
  %v897 = vsel %vm894, %v896, %v892
  %v898 = vmul.f32 1.0, %v897
  %v899 = vmul.f32 %v878, %v774
  %v900 = vmul.f32 %v859, %v879
  %v901 = vadd.f32 %v899, %v900
  %v902 = vtanh.pop %v901
  %v903 = vmul.f32 %v898, %v902
  %v904 = vpack.c.bf16 %v903, %v903
  %s905 = scalar_lea.vmem %s4, 12
  %906 = vst [vmem:[%s905] sm:$0xf] %v904
  %s907 = scalar_lea.vmem [#allocation2], 128
  %v908 = vld [vmem:[%s907] sm:$0xff]
  %v909 = vld [vmem:[%s907 + $0x8] sm:$0xff]
  %v910 = vld [vmem:[%s907 + $0x10] sm:$0xff]
  %v911 = vld [vmem:[%s907 + $0x18] sm:$0xff]
  %912 = vmatpush.bf16.msra.mxu0 %v495
  %913 = vmatpush.bf16.msra.mxu0 %v491
  %914 = vmatpush.bf16.msra.mxu0 %v487
  %915 = vmatpush.bf16.msra.mxu0 %v483
  %916 = vmatpush.bf16.msra.mxu0 %v479
  %917 = vmatpush.bf16.msra.mxu0 %v475
  %918 = vmatpush.bf16.msra.mxu0 %v471
  %919 = vmatpush.bf16.msra.mxu0 %v467
  %920 = vmatmul.bf16.gmra.mxu0 %v904
  %v921 = vpop.f32.mrf.mxu0
  %v922 = vadd.f32 0.0, %v921
  %v923 = vpop.f32.mrf.mxu0
  %924 = vdwg.mxu0
  %925 = vmatpush.bf16.msra.mxu0 %v496
  %926 = vmatpush.bf16.msra.mxu0 %v492
  %927 = vmatpush.bf16.msra.mxu0 %v488
  %928 = vmatpush.bf16.msra.mxu0 %v484
  %929 = vmatpush.bf16.msra.mxu0 %v480
  %930 = vmatpush.bf16.msra.mxu0 %v476
  %931 = vmatpush.bf16.msra.mxu0 %v472
  %932 = vmatpush.bf16.msra.mxu0 %v468
  %933 = vmatmul.bf16.gmra.mxu0 %v904
  %v934 = vpop.f32.mrf.mxu0
  %v935 = vadd.f32 0.0, %v934
  %v936 = vpop.f32.mrf.mxu0
  %937 = vdwg.mxu0
  %938 = vmatpush.bf16.msra.mxu0 %v497
  %939 = vmatpush.bf16.msra.mxu0 %v493
  %940 = vmatpush.bf16.msra.mxu0 %v489
  %941 = vmatpush.bf16.msra.mxu0 %v485
  %942 = vmatpush.bf16.msra.mxu0 %v481
  %943 = vmatpush.bf16.msra.mxu0 %v477
  %944 = vmatpush.bf16.msra.mxu0 %v473
  %945 = vmatpush.bf16.msra.mxu0 %v469
  %946 = vmatmul.bf16.gmra.mxu0 %v904
  %v947 = vpop.f32.mrf.mxu0
  %v948 = vadd.f32 0.0, %v947
  %v949 = vpop.f32.mrf.mxu0
  %950 = vdwg.mxu0
  %951 = vmatpush.bf16.msra.mxu0 %v498
  %952 = vmatpush.bf16.msra.mxu0 %v494
  %953 = vmatpush.bf16.msra.mxu0 %v490
  %954 = vmatpush.bf16.msra.mxu0 %v486
  %955 = vmatpush.bf16.msra.mxu0 %v482
  %956 = vmatpush.bf16.msra.mxu0 %v478
  %957 = vmatpush.bf16.msra.mxu0 %v474
  %958 = vmatpush.bf16.msra.mxu0 %v470
  %959 = vmatmul.bf16.gmra.mxu0 %v904
  %v960 = vpop.f32.mrf.mxu0
  %v961 = vadd.f32 0.0, %v960
  %v962 = vpop.f32.mrf.mxu0
  %963 = vdwg.mxu0
  %v964 = vadd.f32 %v908, %v922
  %v965 = vadd.f32 %v909, %v935
  %v966 = vadd.f32 %v910, %v948
  %v967 = vadd.f32 %v911, %v961
  %v968 = vxor.u32 %v964, 2147483648
  %v969 = vmul.f32 %v968, 1.442695
  %v970 = vpow.pop %v969
  %v971 = vadd.f32 %v970, 1.0
  %v972 = vrcp.pop %v971
  %v973 = vmul.f32 %v971, %v972
  %v974 = vsub.f32 1.0, %v973
  %v975 = vmul.f32 %v972, %v974
  %v976 = vadd.f32 %v972, %v975
  %vm977 = vweird.f32 %v971
  %vm978 = vweird.f32 %v972
  %vm979 = vmor %vm977, %vm978
  %v980 = vsel %vm979, %v972, %v976
  %v981 = vand.u32 2147483647, %v971
  %vm982 = vcmp.eq.f32.partialorder %v981, 8.507059e+37
  %v983 = vand.u32 %v971, 2147483648
  %v984 = vor.u32 1.1754944e-38, %v983
  %v985 = vsel %vm982, %v984, %v980
  %v986 = vmul.f32 1.0, %v985
  %v987 = vxor.u32 %v965, 2147483648
  %v988 = vmul.f32 %v987, 1.442695
  %v989 = vpow.pop %v988
  %v990 = vadd.f32 %v989, 1.0
  %v991 = vrcp.pop %v990
  %v992 = vmul.f32 %v990, %v991
  %v993 = vsub.f32 1.0, %v992
  %v994 = vmul.f32 %v991, %v993
  %v995 = vadd.f32 %v991, %v994
  %vm996 = vweird.f32 %v990
  %vm997 = vweird.f32 %v991
  %vm998 = vmor %vm996, %vm997
  %v999 = vsel %vm998, %v991, %v995
  %v1000 = vand.u32 2147483647, %v990
  %vm1001 = vcmp.eq.f32.partialorder %v1000, 8.507059e+37
  %v1002 = vand.u32 %v990, 2147483648
  %v1003 = vor.u32 1.1754944e-38, %v1002
  %v1004 = vsel %vm1001, %v1003, %v999
  %v1005 = vmul.f32 1.0, %v1004
  %v1006 = vtanh.pop %v966
  %v1007 = vxor.u32 %v967, 2147483648
  %v1008 = vmul.f32 %v1007, 1.442695
  %v1009 = vpow.pop %v1008
  %v1010 = vadd.f32 %v1009, 1.0
  %v1011 = vrcp.pop %v1010
  %v1012 = vmul.f32 %v1010, %v1011
  %v1013 = vsub.f32 1.0, %v1012
  %v1014 = vmul.f32 %v1011, %v1013
  %v1015 = vadd.f32 %v1011, %v1014
  %vm1016 = vweird.f32 %v1010
  %vm1017 = vweird.f32 %v1011
  %vm1018 = vmor %vm1016, %vm1017
  %v1019 = vsel %vm1018, %v1011, %v1015
  %v1020 = vand.u32 2147483647, %v1010
  %vm1021 = vcmp.eq.f32.partialorder %v1020, 8.507059e+37
  %v1022 = vand.u32 %v1010, 2147483648
  %v1023 = vor.u32 1.1754944e-38, %v1022
  %v1024 = vsel %vm1021, %v1023, %v1019
  %v1025 = vmul.f32 1.0, %v1024
  %v1026 = vmul.f32 %v1005, %v901
  %v1027 = vmul.f32 %v986, %v1006
  %v1028 = vadd.f32 %v1026, %v1027
  %v1029 = vtanh.pop %v1028
  %v1030 = vmul.f32 %v1025, %v1029
  %v1031 = vpack.c.bf16 %v1030, %v1030
  %s1032 = scalar_lea.vmem %s4, 16
  %1033 = vst [vmem:[%s1032] sm:$0xf] %v1031
  %s1034 = scalar_lea.vmem [#allocation2], 160
  %v1035 = vld [vmem:[%s1034] sm:$0xff]
  %v1036 = vld [vmem:[%s1034 + $0x8] sm:$0xff]
  %v1037 = vld [vmem:[%s1034 + $0x10] sm:$0xff]
  %v1038 = vld [vmem:[%s1034 + $0x18] sm:$0xff]
  %1039 = vmatpush.bf16.msra.mxu0 %v495
  %1040 = vmatpush.bf16.msra.mxu0 %v491
  %1041 = vmatpush.bf16.msra.mxu0 %v487
  %1042 = vmatpush.bf16.msra.mxu0 %v483
  %1043 = vmatpush.bf16.msra.mxu0 %v479
  %1044 = vmatpush.bf16.msra.mxu0 %v475
  %1045 = vmatpush.bf16.msra.mxu0 %v471
  %1046 = vmatpush.bf16.msra.mxu0 %v467
  %1047 = vmatmul.bf16.gmra.mxu0 %v1031
  %v1048 = vpop.f32.mrf.mxu0
  %v1049 = vadd.f32 0.0, %v1048
  %v1050 = vpop.f32.mrf.mxu0
  %1051 = vdwg.mxu0
  %1052 = vmatpush.bf16.msra.mxu0 %v496
  %1053 = vmatpush.bf16.msra.mxu0 %v492
  %1054 = vmatpush.bf16.msra.mxu0 %v488
  %1055 = vmatpush.bf16.msra.mxu0 %v484
  %1056 = vmatpush.bf16.msra.mxu0 %v480
  %1057 = vmatpush.bf16.msra.mxu0 %v476
  %1058 = vmatpush.bf16.msra.mxu0 %v472
  %1059 = vmatpush.bf16.msra.mxu0 %v468
  %1060 = vmatmul.bf16.gmra.mxu0 %v1031
  %v1061 = vpop.f32.mrf.mxu0
  %v1062 = vadd.f32 0.0, %v1061
  %v1063 = vpop.f32.mrf.mxu0
  %1064 = vdwg.mxu0
  %1065 = vmatpush.bf16.msra.mxu0 %v497
  %1066 = vmatpush.bf16.msra.mxu0 %v493
  %1067 = vmatpush.bf16.msra.mxu0 %v489
  %1068 = vmatpush.bf16.msra.mxu0 %v485
  %1069 = vmatpush.bf16.msra.mxu0 %v481
  %1070 = vmatpush.bf16.msra.mxu0 %v477
  %1071 = vmatpush.bf16.msra.mxu0 %v473
  %1072 = vmatpush.bf16.msra.mxu0 %v469
  %1073 = vmatmul.bf16.gmra.mxu0 %v1031
  %v1074 = vpop.f32.mrf.mxu0
  %v1075 = vadd.f32 0.0, %v1074
  %v1076 = vpop.f32.mrf.mxu0
  %1077 = vdwg.mxu0
  %1078 = vmatpush.bf16.msra.mxu0 %v498
  %1079 = vmatpush.bf16.msra.mxu0 %v494
  %1080 = vmatpush.bf16.msra.mxu0 %v490
  %1081 = vmatpush.bf16.msra.mxu0 %v486
  %1082 = vmatpush.bf16.msra.mxu0 %v482
  %1083 = vmatpush.bf16.msra.mxu0 %v478
  %1084 = vmatpush.bf16.msra.mxu0 %v474
  %1085 = vmatpush.bf16.msra.mxu0 %v470
  %1086 = vmatmul.bf16.gmra.mxu0 %v1031
  %v1087 = vpop.f32.mrf.mxu0
  %v1088 = vadd.f32 0.0, %v1087
  %v1089 = vpop.f32.mrf.mxu0
  %1090 = vdwg.mxu0
  %v1091 = vadd.f32 %v1035, %v1049
  %v1092 = vadd.f32 %v1036, %v1062
  %v1093 = vadd.f32 %v1037, %v1075
  %v1094 = vadd.f32 %v1038, %v1088
  %v1095 = vxor.u32 %v1091, 2147483648
  %v1096 = vmul.f32 %v1095, 1.442695
  %v1097 = vpow.pop %v1096
  %v1098 = vadd.f32 %v1097, 1.0
  %v1099 = vrcp.pop %v1098
  %v1100 = vmul.f32 %v1098, %v1099
  %v1101 = vsub.f32 1.0, %v1100
  %v1102 = vmul.f32 %v1099, %v1101
  %v1103 = vadd.f32 %v1099, %v1102
  %vm1104 = vweird.f32 %v1098
  %vm1105 = vweird.f32 %v1099
  %vm1106 = vmor %vm1104, %vm1105
  %v1107 = vsel %vm1106, %v1099, %v1103
  %v1108 = vand.u32 2147483647, %v1098
  %vm1109 = vcmp.eq.f32.partialorder %v1108, 8.507059e+37
  %v1110 = vand.u32 %v1098, 2147483648
  %v1111 = vor.u32 1.1754944e-38, %v1110
  %v1112 = vsel %vm1109, %v1111, %v1107
  %v1113 = vmul.f32 1.0, %v1112
  %v1114 = vxor.u32 %v1092, 2147483648
  %v1115 = vmul.f32 %v1114, 1.442695
  %v1116 = vpow.pop %v1115
  %v1117 = vadd.f32 %v1116, 1.0
  %v1118 = vrcp.pop %v1117
  %v1119 = vmul.f32 %v1117, %v1118
  %v1120 = vsub.f32 1.0, %v1119
  %v1121 = vmul.f32 %v1118, %v1120
  %v1122 = vadd.f32 %v1118, %v1121
  %vm1123 = vweird.f32 %v1117
  %vm1124 = vweird.f32 %v1118
  %vm1125 = vmor %vm1123, %vm1124
  %v1126 = vsel %vm1125, %v1118, %v1122
  %v1127 = vand.u32 2147483647, %v1117
  %vm1128 = vcmp.eq.f32.partialorder %v1127, 8.507059e+37
  %v1129 = vand.u32 %v1117, 2147483648
  %v1130 = vor.u32 1.1754944e-38, %v1129
  %v1131 = vsel %vm1128, %v1130, %v1126
  %v1132 = vmul.f32 1.0, %v1131
  %v1133 = vtanh.pop %v1093
  %v1134 = vxor.u32 %v1094, 2147483648
  %v1135 = vmul.f32 %v1134, 1.442695
  %v1136 = vpow.pop %v1135
  %v1137 = vadd.f32 %v1136, 1.0
  %v1138 = vrcp.pop %v1137
  %v1139 = vmul.f32 %v1137, %v1138
  %v1140 = vsub.f32 1.0, %v1139
  %v1141 = vmul.f32 %v1138, %v1140
  %v1142 = vadd.f32 %v1138, %v1141
  %vm1143 = vweird.f32 %v1137
  %vm1144 = vweird.f32 %v1138
  %vm1145 = vmor %vm1143, %vm1144
  %v1146 = vsel %vm1145, %v1138, %v1142
  %v1147 = vand.u32 2147483647, %v1137
  %vm1148 = vcmp.eq.f32.partialorder %v1147, 8.507059e+37
  %v1149 = vand.u32 %v1137, 2147483648
  %v1150 = vor.u32 1.1754944e-38, %v1149
  %v1151 = vsel %vm1148, %v1150, %v1146
  %v1152 = vmul.f32 1.0, %v1151
  %v1153 = vmul.f32 %v1132, %v1028
  %v1154 = vmul.f32 %v1113, %v1133
  %v1155 = vadd.f32 %v1153, %v1154
  %v1156 = vtanh.pop %v1155
  %v1157 = vmul.f32 %v1152, %v1156
  %v1158 = vpack.c.bf16 %v1157, %v1157
  %s1159 = scalar_lea.vmem %s4, 20
  %1160 = vst [vmem:[%s1159] sm:$0xf] %v1158
  %s1161 = scalar_lea.vmem [#allocation2], 192
  %v1162 = vld [vmem:[%s1161] sm:$0xff]
  %v1163 = vld [vmem:[%s1161 + $0x8] sm:$0xff]
  %v1164 = vld [vmem:[%s1161 + $0x10] sm:$0xff]
  %v1165 = vld [vmem:[%s1161 + $0x18] sm:$0xff]
  %1166 = vmatpush.bf16.msra.mxu0 %v495
  %1167 = vmatpush.bf16.msra.mxu0 %v491
  %1168 = vmatpush.bf16.msra.mxu0 %v487
  %1169 = vmatpush.bf16.msra.mxu0 %v483
  %1170 = vmatpush.bf16.msra.mxu0 %v479
  %1171 = vmatpush.bf16.msra.mxu0 %v475
  %1172 = vmatpush.bf16.msra.mxu0 %v471
  %1173 = vmatpush.bf16.msra.mxu0 %v467
  %1174 = vmatmul.bf16.gmra.mxu0 %v1158
  %v1175 = vpop.f32.mrf.mxu0
  %v1176 = vadd.f32 0.0, %v1175
  %v1177 = vpop.f32.mrf.mxu0
  %1178 = vdwg.mxu0
  %1179 = vmatpush.bf16.msra.mxu0 %v496
  %1180 = vmatpush.bf16.msra.mxu0 %v492
  %1181 = vmatpush.bf16.msra.mxu0 %v488
  %1182 = vmatpush.bf16.msra.mxu0 %v484
  %1183 = vmatpush.bf16.msra.mxu0 %v480
  %1184 = vmatpush.bf16.msra.mxu0 %v476
  %1185 = vmatpush.bf16.msra.mxu0 %v472
  %1186 = vmatpush.bf16.msra.mxu0 %v468
  %1187 = vmatmul.bf16.gmra.mxu0 %v1158
  %v1188 = vpop.f32.mrf.mxu0
  %v1189 = vadd.f32 0.0, %v1188
  %v1190 = vpop.f32.mrf.mxu0
  %1191 = vdwg.mxu0
  %1192 = vmatpush.bf16.msra.mxu0 %v497
  %1193 = vmatpush.bf16.msra.mxu0 %v493
  %1194 = vmatpush.bf16.msra.mxu0 %v489
  %1195 = vmatpush.bf16.msra.mxu0 %v485
  %1196 = vmatpush.bf16.msra.mxu0 %v481
  %1197 = vmatpush.bf16.msra.mxu0 %v477
  %1198 = vmatpush.bf16.msra.mxu0 %v473
  %1199 = vmatpush.bf16.msra.mxu0 %v469
  %1200 = vmatmul.bf16.gmra.mxu0 %v1158
  %v1201 = vpop.f32.mrf.mxu0
  %v1202 = vadd.f32 0.0, %v1201
  %v1203 = vpop.f32.mrf.mxu0
  %1204 = vdwg.mxu0
  %1205 = vmatpush.bf16.msra.mxu0 %v498
  %1206 = vmatpush.bf16.msra.mxu0 %v494
  %1207 = vmatpush.bf16.msra.mxu0 %v490
  %1208 = vmatpush.bf16.msra.mxu0 %v486
  %1209 = vmatpush.bf16.msra.mxu0 %v482
  %1210 = vmatpush.bf16.msra.mxu0 %v478
  %1211 = vmatpush.bf16.msra.mxu0 %v474
  %1212 = vmatpush.bf16.msra.mxu0 %v470
  %1213 = vmatmul.bf16.gmra.mxu0 %v1158
  %v1214 = vpop.f32.mrf.mxu0
  %v1215 = vadd.f32 0.0, %v1214
  %v1216 = vpop.f32.mrf.mxu0
  %1217 = vdwg.mxu0
  %v1218 = vadd.f32 %v1162, %v1176
  %v1219 = vadd.f32 %v1163, %v1189
  %v1220 = vadd.f32 %v1164, %v1202
  %v1221 = vadd.f32 %v1165, %v1215
  %v1222 = vxor.u32 %v1218, 2147483648
  %v1223 = vmul.f32 %v1222, 1.442695
  %v1224 = vpow.pop %v1223
  %v1225 = vadd.f32 %v1224, 1.0
  %v1226 = vrcp.pop %v1225
  %v1227 = vmul.f32 %v1225, %v1226
  %v1228 = vsub.f32 1.0, %v1227
  %v1229 = vmul.f32 %v1226, %v1228
  %v1230 = vadd.f32 %v1226, %v1229
  %vm1231 = vweird.f32 %v1225
  %vm1232 = vweird.f32 %v1226
  %vm1233 = vmor %vm1231, %vm1232
  %v1234 = vsel %vm1233, %v1226, %v1230
  %v1235 = vand.u32 2147483647, %v1225
  %vm1236 = vcmp.eq.f32.partialorder %v1235, 8.507059e+37
  %v1237 = vand.u32 %v1225, 2147483648
  %v1238 = vor.u32 1.1754944e-38, %v1237
  %v1239 = vsel %vm1236, %v1238, %v1234
  %v1240 = vmul.f32 1.0, %v1239
  %v1241 = vxor.u32 %v1219, 2147483648
  %v1242 = vmul.f32 %v1241, 1.442695
  %v1243 = vpow.pop %v1242
  %v1244 = vadd.f32 %v1243, 1.0
  %v1245 = vrcp.pop %v1244
  %v1246 = vmul.f32 %v1244, %v1245
  %v1247 = vsub.f32 1.0, %v1246
  %v1248 = vmul.f32 %v1245, %v1247
  %v1249 = vadd.f32 %v1245, %v1248
  %vm1250 = vweird.f32 %v1244
  %vm1251 = vweird.f32 %v1245
  %vm1252 = vmor %vm1250, %vm1251
  %v1253 = vsel %vm1252, %v1245, %v1249
  %v1254 = vand.u32 2147483647, %v1244
  %vm1255 = vcmp.eq.f32.partialorder %v1254, 8.507059e+37
  %v1256 = vand.u32 %v1244, 2147483648
  %v1257 = vor.u32 1.1754944e-38, %v1256
  %v1258 = vsel %vm1255, %v1257, %v1253
  %v1259 = vmul.f32 1.0, %v1258
  %v1260 = vtanh.pop %v1220
  %v1261 = vxor.u32 %v1221, 2147483648
  %v1262 = vmul.f32 %v1261, 1.442695
  %v1263 = vpow.pop %v1262
  %v1264 = vadd.f32 %v1263, 1.0
  %v1265 = vrcp.pop %v1264
  %v1266 = vmul.f32 %v1264, %v1265
  %v1267 = vsub.f32 1.0, %v1266
  %v1268 = vmul.f32 %v1265, %v1267
  %v1269 = vadd.f32 %v1265, %v1268
  %vm1270 = vweird.f32 %v1264
  %vm1271 = vweird.f32 %v1265
  %vm1272 = vmor %vm1270, %vm1271
  %v1273 = vsel %vm1272, %v1265, %v1269
  %v1274 = vand.u32 2147483647, %v1264
  %vm1275 = vcmp.eq.f32.partialorder %v1274, 8.507059e+37
  %v1276 = vand.u32 %v1264, 2147483648
  %v1277 = vor.u32 1.1754944e-38, %v1276
  %v1278 = vsel %vm1275, %v1277, %v1273
  %v1279 = vmul.f32 1.0, %v1278
  %v1280 = vmul.f32 %v1259, %v1155
  %v1281 = vmul.f32 %v1240, %v1260
  %v1282 = vadd.f32 %v1280, %v1281
  %v1283 = vtanh.pop %v1282
  %v1284 = vmul.f32 %v1279, %v1283
  %v1285 = vpack.c.bf16 %v1284, %v1284
  %s1286 = scalar_lea.vmem %s4, 24
  %1287 = vst [vmem:[%s1286] sm:$0xf] %v1285
  %s1288 = scalar_lea.vmem [#allocation2], 224
  %v1289 = vld [vmem:[%s1288] sm:$0xff]
  %v1290 = vld [vmem:[%s1288 + $0x8] sm:$0xff]
  %v1291 = vld [vmem:[%s1288 + $0x10] sm:$0xff]
  %v1292 = vld [vmem:[%s1288 + $0x18] sm:$0xff]
  %1293 = vmatpush.bf16.msra.mxu0 %v495
  %1294 = vmatpush.bf16.msra.mxu0 %v491
  %1295 = vmatpush.bf16.msra.mxu0 %v487
  %1296 = vmatpush.bf16.msra.mxu0 %v483
  %1297 = vmatpush.bf16.msra.mxu0 %v479
  %1298 = vmatpush.bf16.msra.mxu0 %v475
  %1299 = vmatpush.bf16.msra.mxu0 %v471
  %1300 = vmatpush.bf16.msra.mxu0 %v467
  %1301 = vmatmul.bf16.gmra.mxu0 %v1285
  %v1302 = vpop.f32.mrf.mxu0
  %v1303 = vadd.f32 0.0, %v1302
  %v1304 = vpop.f32.mrf.mxu0
  %1305 = vdwg.mxu0
  %1306 = vmatpush.bf16.msra.mxu0 %v496
  %1307 = vmatpush.bf16.msra.mxu0 %v492
  %1308 = vmatpush.bf16.msra.mxu0 %v488
  %1309 = vmatpush.bf16.msra.mxu0 %v484
  %1310 = vmatpush.bf16.msra.mxu0 %v480
  %1311 = vmatpush.bf16.msra.mxu0 %v476
  %1312 = vmatpush.bf16.msra.mxu0 %v472
  %1313 = vmatpush.bf16.msra.mxu0 %v468
  %1314 = vmatmul.bf16.gmra.mxu0 %v1285
  %v1315 = vpop.f32.mrf.mxu0
  %v1316 = vadd.f32 0.0, %v1315
  %v1317 = vpop.f32.mrf.mxu0
  %1318 = vdwg.mxu0
  %1319 = vmatpush.bf16.msra.mxu0 %v497
  %1320 = vmatpush.bf16.msra.mxu0 %v493
  %1321 = vmatpush.bf16.msra.mxu0 %v489
  %1322 = vmatpush.bf16.msra.mxu0 %v485
  %1323 = vmatpush.bf16.msra.mxu0 %v481
  %1324 = vmatpush.bf16.msra.mxu0 %v477
  %1325 = vmatpush.bf16.msra.mxu0 %v473
  %1326 = vmatpush.bf16.msra.mxu0 %v469
  %1327 = vmatmul.bf16.gmra.mxu0 %v1285
  %v1328 = vpop.f32.mrf.mxu0
  %v1329 = vadd.f32 0.0, %v1328
  %v1330 = vpop.f32.mrf.mxu0
  %1331 = vdwg.mxu0
  %1332 = vmatpush.bf16.msra.mxu0 %v498
  %1333 = vmatpush.bf16.msra.mxu0 %v494
  %1334 = vmatpush.bf16.msra.mxu0 %v490
  %1335 = vmatpush.bf16.msra.mxu0 %v486
  %1336 = vmatpush.bf16.msra.mxu0 %v482
  %1337 = vmatpush.bf16.msra.mxu0 %v478
  %1338 = vmatpush.bf16.msra.mxu0 %v474
  %1339 = vmatpush.bf16.msra.mxu0 %v470
  %1340 = vmatmul.bf16.gmra.mxu0 %v1285
  %v1341 = vpop.f32.mrf.mxu0
  %v1342 = vadd.f32 0.0, %v1341
  %v1343 = vpop.f32.mrf.mxu0
  %1344 = vdwg.mxu0
  %v1345 = vadd.f32 %v1289, %v1303
  %v1346 = vadd.f32 %v1290, %v1316
  %v1347 = vadd.f32 %v1291, %v1329
  %v1348 = vadd.f32 %v1292, %v1342
  %v1349 = vxor.u32 %v1345, 2147483648
  %v1350 = vmul.f32 %v1349, 1.442695
  %v1351 = vpow.pop %v1350
  %v1352 = vadd.f32 %v1351, 1.0
  %v1353 = vrcp.pop %v1352
  %v1354 = vmul.f32 %v1352, %v1353
  %v1355 = vsub.f32 1.0, %v1354
  %v1356 = vmul.f32 %v1353, %v1355
  %v1357 = vadd.f32 %v1353, %v1356
  %vm1358 = vweird.f32 %v1352
  %vm1359 = vweird.f32 %v1353
  %vm1360 = vmor %vm1358, %vm1359
  %v1361 = vsel %vm1360, %v1353, %v1357
  %v1362 = vand.u32 2147483647, %v1352
  %vm1363 = vcmp.eq.f32.partialorder %v1362, 8.507059e+37
  %v1364 = vand.u32 %v1352, 2147483648
  %v1365 = vor.u32 1.1754944e-38, %v1364
  %v1366 = vsel %vm1363, %v1365, %v1361
  %v1367 = vmul.f32 1.0, %v1366
  %v1368 = vxor.u32 %v1346, 2147483648
  %v1369 = vmul.f32 %v1368, 1.442695
  %v1370 = vpow.pop %v1369
  %v1371 = vadd.f32 %v1370, 1.0
  %v1372 = vrcp.pop %v1371
  %v1373 = vmul.f32 %v1371, %v1372
  %v1374 = vsub.f32 1.0, %v1373
  %v1375 = vmul.f32 %v1372, %v1374
  %v1376 = vadd.f32 %v1372, %v1375
  %vm1377 = vweird.f32 %v1371
  %vm1378 = vweird.f32 %v1372
  %vm1379 = vmor %vm1377, %vm1378
  %v1380 = vsel %vm1379, %v1372, %v1376
  %v1381 = vand.u32 2147483647, %v1371
  %vm1382 = vcmp.eq.f32.partialorder %v1381, 8.507059e+37
  %v1383 = vand.u32 %v1371, 2147483648
  %v1384 = vor.u32 1.1754944e-38, %v1383
  %v1385 = vsel %vm1382, %v1384, %v1380
  %v1386 = vmul.f32 1.0, %v1385
  %v1387 = vtanh.pop %v1347
  %v1388 = vxor.u32 %v1348, 2147483648
  %v1389 = vmul.f32 %v1388, 1.442695
  %v1390 = vpow.pop %v1389
  %v1391 = vadd.f32 %v1390, 1.0
  %v1392 = vrcp.pop %v1391
  %v1393 = vmul.f32 %v1391, %v1392
  %v1394 = vsub.f32 1.0, %v1393
  %v1395 = vmul.f32 %v1392, %v1394
  %v1396 = vadd.f32 %v1392, %v1395
  %vm1397 = vweird.f32 %v1391
  %vm1398 = vweird.f32 %v1392
  %vm1399 = vmor %vm1397, %vm1398
  %v1400 = vsel %vm1399, %v1392, %v1396
  %v1401 = vand.u32 2147483647, %v1391
  %vm1402 = vcmp.eq.f32.partialorder %v1401, 8.507059e+37
  %v1403 = vand.u32 %v1391, 2147483648
  %v1404 = vor.u32 1.1754944e-38, %v1403
  %v1405 = vsel %vm1402, %v1404, %v1400
  %v1406 = vmul.f32 1.0, %v1405
  %v1407 = vmul.f32 %v1386, %v1282
  %v1408 = vmul.f32 %v1367, %v1387
  %v1409 = vadd.f32 %v1407, %v1408
  %v1410 = vtanh.pop %v1409
  %v1411 = vmul.f32 %v1406, %v1410
  %v1412 = vpack.c.bf16 %v1411, %v1411
  %s1413 = scalar_lea.vmem %s4, 28
  %1414 = vst [vmem:[%s1413] sm:$0xf] %v1412
  // Predicated region
  $region18: #{decoder_rnn_forward.2} parent=0 // pred_check
    _
  $region19: #{decoder_rnn_forward.2} parent=0 // pred_check_branch
    %1416 = sbr.rel (0) target = $region21
  $region20: #{decoder_rnn_forward.2} parent=0 // pred_region
    _
  $region21: #{decoder_rnn_forward.2} parent=0 // pred_fallthru
    _
  // Predicated region
  $region22: #{decoder_rnn_forward.2} parent=0 // pred_check
    _
  $region23: #{decoder_rnn_forward.2} parent=0 // pred_check_branch
    %1418 = sbr.rel (0) target = $region25
  $region24: #{decoder_rnn_forward.2} parent=0 // pred_region
    _
  $region25: #{decoder_rnn_forward.2} parent=0 // pred_fallthru
    _

</llo_original>
